<compile_context>
chip_gen: v5e
topology: v5e:2x2
jax: 0.10.0
libtpu: 0.0.40
codegen_flags: <defaults>
</compile_context>

<pallas_src>
import functools

import jax
import jax.numpy as jnp
from jax.experimental import pallas as pl
from jax.experimental.pallas import tpu as pltpu

LN_EPS = 1e-5                     # nn.LayerNorm default eps
_INV_SQRT2 = 0.7071067811865476


def _mlp_kernel(x_ref, w1_ref, b1_ref, gamma_ref, beta_ref, w2_ref, b2_ref,
                o_ref, *, approximate_gelu):
    # x_ref block: (1, C_in, tile_n) — channels on sublanes, positions on lanes.
    # Cast the activation tile to the matmul dtype (no-op when already equal).
    x = x_ref[0].astype(w1_ref.dtype)                            # (C_in, tile_n)

    # fc1 (Conv1d k=1): h = W1 @ x + b1; MXU matmul, f32 accumulation.
    h = jnp.dot(w1_ref[...], x, preferred_element_type=jnp.float32)   # (H, tn) f32
    h = h + b1_ref[...]                                          # (H, 1) broadcast

    # LayerNorm over the hidden axis (sublanes) — two-pass mean/variance.
    mean = jnp.mean(h, axis=0, keepdims=True)                    # (1, tile_n)
    d = h - mean
    var = jnp.mean(d * d, axis=0, keepdims=True)
    h = d * jax.lax.rsqrt(var + LN_EPS)
    h = h * gamma_ref[...] + beta_ref[...]

    # GELU — exact erf form by default (matches PyTorch nn.GELU()); optional
    # tanh approximation goes to the EUP slot instead of a VALU polynomial.
    if approximate_gelu:
        h = jax.nn.gelu(h, approximate=True)
    else:
        h = 0.5 * h * (1.0 + jax.lax.erf(h * _INV_SQRT2))

    # Dropout: nn.Dropout in eval mode is identity.

    # fc2 (Conv1d k=1): y = W2 @ h + b2  (fc2 operand cast to matmul dtype).
    y = jnp.dot(w2_ref[...], h.astype(w2_ref.dtype),
                preferred_element_type=jnp.float32)              # (C_out, tn)
    y = y + b2_ref[...]                                          # (C_out, 1)

    o_ref[0] = y.astype(o_ref.dtype)


def _round_up(v, m):
    return (v + m - 1) // m * m


def _device_vmem_bytes():
    try:
        return int(pltpu.get_tpu_info().vmem_capacity_bytes)
    except Exception:
        return 64 * 2**20          # conservative (v7x per-TC VMEM)


def _pick_tile_n(N, B, C_in, H, C_out, x_bytes, w_bytes, vmem_budget):
    """Largest lane tile (multiple of 128) whose VMEM estimate fits the budget."""
    n_ceil = _round_up(N, 128)
    tn = 128
    for cand in (2048, 1024, 512, 256, 128):
        if cand > n_ceil:
            continue
        est = (2 * (C_in + C_out) * cand * x_bytes        # double-buffered io tiles
               + H * (C_in + C_out) * w_bytes             # single-buffered weights
               + (3 * H + C_out) * 4                      # biases / LN params
               + (4 * H + 2 * C_out) * cand * 4)          # live f32 intermediates
        if est <= vmem_budget:
            tn = cand
            break
    tn = min(tn, n_ceil)
    # v7x megacore: make sure both TensorCores get work when B == 1.
    if B == 1 and N > 128:
        while tn > 128 and -(-N // tn) < 2:
            tn //= 2
        tn = max(_round_up(tn, 128), 128)
    return tn


def _const_spec(shape):
    """BlockSpec for grid-invariant operands: fetched once, single-buffered."""
    index_map = lambda b, n: (0, 0)
    try:
        return pl.BlockSpec(shape, index_map, pipeline_mode=pl.Buffered(1))
    except (TypeError, AttributeError):
        return pl.BlockSpec(shape, index_map)


@functools.partial(
    jax.jit, static_argnames=("tile_n", "use_bf16_matmul", "approximate_gelu"))
def mlp_forward(x, w1, b1, gamma, beta, w2, b2, *, tile_n=None,
                use_bf16_matmul=False, approximate_gelu=False):
    """Forward pass of the Mlp module.

    x:     (B, C_in, N)   NCL, like the PyTorch Conv1d input
    w1:    (H, C_in)      Conv1d(C_in, H, 1) weight (kernel dim squeezed)
    b1:    (H,)           fc1 bias
    gamma: (H,)           LayerNorm weight
    beta:  (H,)           LayerNorm bias
    w2:    (C_out, H)     Conv1d(H, C_out, 1) weight
    b2:    (C_out,)       fc2 bias
    returns (B, C_out, N)
    """
    B, C_in, N = x.shape
    H = w1.shape[0]
    C_out = w2.shape[0]

    # Optional bf16 MXU operands (full-rate on v5e/v6e/v7x); f32 accumulation
    # is kept via preferred_element_type inside the kernel.
    if use_bf16_matmul and w1.dtype == jnp.float32:
        w1 = w1.astype(jnp.bfloat16)
    if use_bf16_matmul and w2.dtype == jnp.float32:
        w2 = w2.astype(jnp.bfloat16)

    vmem_cap = _device_vmem_bytes()
    vmem_budget = max(16 * 2**20, vmem_cap - 16 * 2**20)   # leave DMA headroom

    if tile_n is None:
        tn = _pick_tile_n(N, B, C_in, H, C_out,
                          x.dtype.itemsize, w1.dtype.itemsize, vmem_budget)
    else:
        tn = min(_round_up(int(tile_n), 128), _round_up(N, 128))

    grid = (B, pl.cdiv(N, tn))      # partial edge tile handled by masked stores

    # Column-vector params broadcast across the lane (N) axis inside the kernel.
    b1c = b1.reshape(H, 1).astype(jnp.float32)
    gammac = gamma.reshape(H, 1).astype(jnp.float32)
    betac = beta.reshape(H, 1).astype(jnp.float32)
    b2c = b2.reshape(C_out, 1).astype(jnp.float32)

    cost = pl.CostEstimate(
        flops=2 * B * N * (C_in * H + H * C_out),
        transcendentals=B * N * H,                   # erf/tanh in the GELU
        bytes_accessed=(x.size * x.dtype.itemsize
                        + (w1.size + w2.size) * w1.dtype.itemsize
                        + (3 * H + C_out) * 4
                        + B * C_out * N * x.dtype.itemsize),
    )

    out = pl.pallas_call(
        functools.partial(_mlp_kernel, approximate_gelu=approximate_gelu),
        out_shape=jax.ShapeDtypeStruct((B, C_out, N), x.dtype),
        grid_spec=pltpu.PrefetchScalarGridSpec(
            num_scalar_prefetch=0,
            grid=grid,
            in_specs=[
                pl.BlockSpec((1, C_in, tn), lambda b, n: (b, 0, n)),   # x tile
                _const_spec((H, C_in)),                                # W1
                _const_spec((H, 1)),                                   # b1
                _const_spec((H, 1)),                                   # LN gamma
                _const_spec((H, 1)),                                   # LN beta
                _const_spec((C_out, H)),                               # W2
                _const_spec((C_out, 1)),                               # b2
            ],
            out_specs=pl.BlockSpec((1, C_out, tn), lambda b, n: (b, 0, n)),
        ),
        compiler_params=pltpu.CompilerParams(
            dimension_semantics=("parallel", "parallel"),
            vmem_limit_bytes=int(vmem_budget),
        ),
        cost_estimate=cost,
    )(x, w1, b1c, gammac, betac, w2, b2c)

    return out


def _reference(x, w1, b1, gamma, beta, w2, b2):
    """Pure-JAX reference mirroring the PyTorch forward (eval mode), NCL layout."""
    x32 = x.astype(jnp.float32)
    h = jnp.einsum("hc,bcn->bhn", w1.astype(jnp.float32), x32)
    h = h + b1[None, :, None]
    mu = jnp.mean(h, axis=1, keepdims=True)
    var = jnp.mean((h - mu) ** 2, axis=1, keepdims=True)
    h = (h - mu) * jax.lax.rsqrt(var + LN_EPS)
    h = h * gamma[None, :, None] + beta[None, :, None]
    h = 0.5 * h * (1.0 + jax.lax.erf(h * _INV_SQRT2))
    y = jnp.einsum("oh,bhn->bon", w2.astype(jnp.float32), h)
    y = y + b2[None, :, None]
    return y.astype(x.dtype)


if __name__ == "__main__":
    key = jax.random.PRNGKey(0)
    kx, k1, k2, k3, k4 = jax.random.split(key, 5)

    # Small shapes consistent with the module: Conv1d input is (B, C_in, N).
    # N = 384 is NOT a multiple of the lane tile -> exercises the partial
    # edge block (no HBM pad/slice in the wrapper).
    B, C_in, N = 2, 16, 384
    H = 32            # hidden_features
    C_out = C_in      # out_features defaults to in_features

    x = jax.random.normal(kx, (B, C_in, N), dtype=jnp.float32)

    # Conv1d(C_in, H, 1) weight is (H, C_in, 1) in PyTorch; stored with the
    # trailing kernel dim squeezed -> (H, C_in).
    w1 = jax.random.normal(k1, (H, C_in), dtype=jnp.float32) * 0.1
    b1 = jax.random.normal(k2, (H,), dtype=jnp.float32) * 0.1
    gamma = jnp.ones((H,), dtype=jnp.float32)       # LayerNorm weight
    beta = jnp.zeros((H,), dtype=jnp.float32)       # LayerNorm bias
    w2 = jax.random.normal(k3, (C_out, H), dtype=jnp.float32) * 0.1
    b2 = jax.random.normal(k4, (C_out,), dtype=jnp.float32) * 0.1

    y_ref = _reference(x, w1, b1, gamma, beta, w2, b2)

    # Exact (native-dtype MXU, erf GELU) path.
    y = jax.block_until_ready(mlp_forward(x, w1, b1, gamma, beta, w2, b2))
    assert y.shape == (B, C_out, N), y.shape
    max_err = float(jnp.max(jnp.abs(y - y_ref)))
    assert max_err < 2e-4, max_err

    # bf16-MXU fast path (perf-review item) — looser tolerance vs f32 reference.
    y_bf = jax.block_until_ready(
        mlp_forward(x, w1, b1, gamma, beta, w2, b2, use_bf16_matmul=True))
    max_err_bf = float(jnp.max(jnp.abs(y_bf - y_ref)))
    assert max_err_bf < 6e-2, max_err_bf

    print("KERNEL_OK")
</pallas_src>

<mosaic_0001>
module attributes {stable_mosaic.version = 11 : i64} {
  func.func @_mlp_kernel(%arg0: i32, %arg1: i32, %arg2: memref<1x16x256xf32, #tpu.memory_space<vmem>>, %arg3: memref<32x16xf32, #tpu.memory_space<vmem>>, %arg4: memref<32x1xf32, #tpu.memory_space<vmem>>, %arg5: memref<32x1xf32, #tpu.memory_space<vmem>>, %arg6: memref<32x1xf32, #tpu.memory_space<vmem>>, %arg7: memref<16x32xf32, #tpu.memory_space<vmem>>, %arg8: memref<16x1xf32, #tpu.memory_space<vmem>>, %arg9: memref<1x16x256xf32, #tpu.memory_space<vmem>>) attributes {dimension_semantics = [#tpu.dimension_semantics<parallel>, #tpu.dimension_semantics<parallel>], iteration_bounds = array<i64: 2, 2>, scalar_prefetch = 0 : i64, scratch_operands = 0 : i64, tpu.core_type = #tpu.core_type<tc>, window_params = [{transform_indices = @transform_0, window_bounds = array<i64: 1, 16, 256>}, {pipeline_mode = #tpu.pipeline_mode<synchronous>, transform_indices = @transform_1, window_bounds = array<i64: 32, 16>}, {pipeline_mode = #tpu.pipeline_mode<synchronous>, transform_indices = @transform_2, window_bounds = array<i64: 32, 1>}, {pipeline_mode = #tpu.pipeline_mode<synchronous>, transform_indices = @transform_3, window_bounds = array<i64: 32, 1>}, {pipeline_mode = #tpu.pipeline_mode<synchronous>, transform_indices = @transform_4, window_bounds = array<i64: 32, 1>}, {pipeline_mode = #tpu.pipeline_mode<synchronous>, transform_indices = @transform_5, window_bounds = array<i64: 16, 32>}, {pipeline_mode = #tpu.pipeline_mode<synchronous>, transform_indices = @transform_6, window_bounds = array<i64: 16, 1>}, {transform_indices = @transform_7, window_bounds = array<i64: 1, 16, 256>}]} {
    %c0 = arith.constant 0 : index
    %c0_0 = arith.constant 0 : index
    %c0_1 = arith.constant 0 : index
    %0 = vector.load %arg2[%c0, %c0_0, %c0_1] : memref<1x16x256xf32, #tpu.memory_space<vmem>>, vector<1x16x256xf32>
    %1 = vector.shape_cast %0 : vector<1x16x256xf32> to vector<16x256xf32>
    %c0_2 = arith.constant 0 : index
    %c0_3 = arith.constant 0 : index
    %2 = vector.load %arg3[%c0_2, %c0_3] : memref<32x16xf32, #tpu.memory_space<vmem>>, vector<32x16xf32>
    %cst = arith.constant dense<0.000000e+00> : vector<32x256xf32>
    %3 = tpu.matmul %2, %1, %cst {dimension_numbers = #tpu.dot_dimension_numbers<[1], [0], [0], [1], [0, 0, 1, 1], [], []>} : vector<32x16xf32>, vector<16x256xf32>, vector<32x256xf32> -> vector<32x256xf32>
    %c0_4 = arith.constant 0 : index
    %c0_5 = arith.constant 0 : index
    %4 = vector.load %arg4[%c0_4, %c0_5] : memref<32x1xf32, #tpu.memory_space<vmem>>, vector<32x1xf32>
    %5 = vector.broadcast %4 : vector<32x1xf32> to vector<32x256xf32>
    %6 = arith.addf %3, %5 : vector<32x256xf32>
    %cst_6 = arith.constant dense<0.000000e+00> : vector<256xf32>
    %7 = vector.multi_reduction <add>, %6, %cst_6 [0] : vector<32x256xf32> to vector<256xf32>
    %8 = vector.shape_cast %7 : vector<256xf32> to vector<1x256xf32>
    %cst_7 = arith.constant 3.200000e+01 : f32
    %9 = vector.broadcast %cst_7 : f32 to vector<1x256xf32>
    %10 = arith.divf %8, %9 : vector<1x256xf32>
    %11 = vector.broadcast %10 : vector<1x256xf32> to vector<32x256xf32>
    %12 = arith.subf %6, %11 : vector<32x256xf32>
    %13 = arith.mulf %12, %12 : vector<32x256xf32>
    %cst_8 = arith.constant dense<0.000000e+00> : vector<256xf32>
    %14 = vector.multi_reduction <add>, %13, %cst_8 [0] : vector<32x256xf32> to vector<256xf32>
    %15 = vector.shape_cast %14 : vector<256xf32> to vector<1x256xf32>
    %cst_9 = arith.constant 3.200000e+01 : f32
    %16 = vector.broadcast %cst_9 : f32 to vector<1x256xf32>
    %17 = arith.divf %15, %16 : vector<1x256xf32>
    %cst_10 = arith.constant 9.99999974E-6 : f32
    %18 = vector.broadcast %cst_10 : f32 to vector<1x256xf32>
    %19 = arith.addf %17, %18 : vector<1x256xf32>
    %20 = math.rsqrt %19 : vector<1x256xf32>
    %21 = vector.broadcast %20 : vector<1x256xf32> to vector<32x256xf32>
    %22 = arith.mulf %12, %21 : vector<32x256xf32>
    %c0_11 = arith.constant 0 : index
    %c0_12 = arith.constant 0 : index
    %23 = vector.load %arg5[%c0_11, %c0_12] : memref<32x1xf32, #tpu.memory_space<vmem>>, vector<32x1xf32>
    %24 = vector.broadcast %23 : vector<32x1xf32> to vector<32x256xf32>
    %25 = arith.mulf %22, %24 : vector<32x256xf32>
    %c0_13 = arith.constant 0 : index
    %c0_14 = arith.constant 0 : index
    %26 = vector.load %arg6[%c0_13, %c0_14] : memref<32x1xf32, #tpu.memory_space<vmem>>, vector<32x1xf32>
    %27 = vector.broadcast %26 : vector<32x1xf32> to vector<32x256xf32>
    %28 = arith.addf %25, %27 : vector<32x256xf32>
    %cst_15 = arith.constant 5.000000e-01 : f32
    %29 = vector.broadcast %cst_15 : f32 to vector<32x256xf32>
    %30 = arith.mulf %29, %28 : vector<32x256xf32>
    %cst_16 = arith.constant 0.707106769 : f32
    %31 = vector.broadcast %cst_16 : f32 to vector<32x256xf32>
    %32 = arith.mulf %28, %31 : vector<32x256xf32>
    %33 = math.erf %32 : vector<32x256xf32>
    %cst_17 = arith.constant 1.000000e+00 : f32
    %34 = vector.broadcast %cst_17 : f32 to vector<32x256xf32>
    %35 = arith.addf %34, %33 : vector<32x256xf32>
    %36 = arith.mulf %30, %35 : vector<32x256xf32>
    %c0_18 = arith.constant 0 : index
    %c0_19 = arith.constant 0 : index
    %37 = vector.load %arg7[%c0_18, %c0_19] : memref<16x32xf32, #tpu.memory_space<vmem>>, vector<16x32xf32>
    %cst_20 = arith.constant dense<0.000000e+00> : vector<16x256xf32>
    %38 = tpu.matmul %37, %36, %cst_20 {dimension_numbers = #tpu.dot_dimension_numbers<[1], [0], [0], [1], [0, 0, 1, 1], [], []>} : vector<16x32xf32>, vector<32x256xf32>, vector<16x256xf32> -> vector<16x256xf32>
    %c0_21 = arith.constant 0 : index
    %c0_22 = arith.constant 0 : index
    %39 = vector.load %arg8[%c0_21, %c0_22] : memref<16x1xf32, #tpu.memory_space<vmem>>, vector<16x1xf32>
    %40 = vector.broadcast %39 : vector<16x1xf32> to vector<16x256xf32>
    %41 = arith.addf %38, %40 : vector<16x256xf32>
    %c0_23 = arith.constant 0 : index
    %c0_24 = arith.constant 0 : index
    %c0_25 = arith.constant 0 : index
    %42 = vector.load %arg9[%c0_23, %c0_24, %c0_25] : memref<1x16x256xf32, #tpu.memory_space<vmem>>, vector<1x16x256xf32>
    %43 = vector.shape_cast %42 : vector<1x16x256xf32> to vector<16x256xf32>
    %44 = vector.shape_cast %41 : vector<16x256xf32> to vector<1x16x256xf32>
    tpu.vector_store %arg9[%c0_23, %c0_24, %c0_25], %44 {strides = array<i32>} : memref<1x16x256xf32, #tpu.memory_space<vmem>>, vector<1x16x256xf32>,
    return
  }
  func.func @transform_0(%arg0: i32, %arg1: i32) -> (i32, i32, i32) {
    %c0_i32 = arith.constant 0 : i32
    %c0_i32_0 = arith.constant 0 : i32
    return %arg0, %c0_i32, %arg1 : i32, i32, i32
  }
  func.func @transform_1(%arg0: i32, %arg1: i32) -> (i32, i32) {
    %c0_i32 = arith.constant 0 : i32
    %c0_i32_0 = arith.constant 0 : i32
    %c0_i32_1 = arith.constant 0 : i32
    return %c0_i32, %c0_i32_0 : i32, i32
  }
  func.func @transform_2(%arg0: i32, %arg1: i32) -> (i32, i32) {
    %c0_i32 = arith.constant 0 : i32
    %c0_i32_0 = arith.constant 0 : i32
    %c0_i32_1 = arith.constant 0 : i32
    return %c0_i32, %c0_i32_0 : i32, i32
  }
  func.func @transform_3(%arg0: i32, %arg1: i32) -> (i32, i32) {
    %c0_i32 = arith.constant 0 : i32
    %c0_i32_0 = arith.constant 0 : i32
    %c0_i32_1 = arith.constant 0 : i32
    return %c0_i32, %c0_i32_0 : i32, i32
  }
  func.func @transform_4(%arg0: i32, %arg1: i32) -> (i32, i32) {
    %c0_i32 = arith.constant 0 : i32
    %c0_i32_0 = arith.constant 0 : i32
    %c0_i32_1 = arith.constant 0 : i32
    return %c0_i32, %c0_i32_0 : i32, i32
  }
  func.func @transform_5(%arg0: i32, %arg1: i32) -> (i32, i32) {
    %c0_i32 = arith.constant 0 : i32
    %c0_i32_0 = arith.constant 0 : i32
    %c0_i32_1 = arith.constant 0 : i32
    return %c0_i32, %c0_i32_0 : i32, i32
  }
  func.func @transform_6(%arg0: i32, %arg1: i32) -> (i32, i32) {
    %c0_i32 = arith.constant 0 : i32
    %c0_i32_0 = arith.constant 0 : i32
    %c0_i32_1 = arith.constant 0 : i32
    return %c0_i32, %c0_i32_0 : i32, i32
  }
  func.func @transform_7(%arg0: i32, %arg1: i32) -> (i32, i32, i32) {
    %c0_i32 = arith.constant 0 : i32
    %c0_i32_0 = arith.constant 0 : i32
    return %arg0, %c0_i32, %arg1 : i32, i32, i32
  }
}

</mosaic_0001>

<llo_original>
// kernel: mlp_forward.1
$region0: #{mlp_forward.1}
  #allocation0 [shape = 'u32[]', space=smem, size = 0x4, offset = 0x4, fixed_abs, tag = 'smem constant byte address 0x4 - core index']
  #allocation1 [shape = 'u32[72,128]{1,0:T(1,128)}', space=vmem, size = 0x9000, scoped, tag = 'internal scratch']
  %s0 = inlined_call_operand.vmem [shape: f32[2,16,384], index: 0, kind: input, shape index: {}]
  %s1 = inlined_call_operand.vmem [shape: f32[32,16], index: 1, kind: input, shape index: {}]
  %s2 = inlined_call_operand.vmem [shape: f32[32,1], index: 2, kind: input, shape index: {}]
  %s3 = inlined_call_operand.vmem [shape: f32[32,1], index: 3, kind: input, shape index: {}]
  %s4 = inlined_call_operand.vmem [shape: f32[32,1], index: 4, kind: input, shape index: {}]
  %s5 = inlined_call_operand.vmem [shape: f32[16,32], index: 5, kind: input, shape index: {}]
  %s6 = inlined_call_operand.vmem [shape: f32[16,1], index: 6, kind: input, shape index: {}]
  %s7 = inlined_call_operand.hbm [shape: f32[2,16,384], index: 7, kind: output, shape index: {}]
  %s8 = sld [smem:[#allocation0]]
  $region127: #{mlp_forward.1} parent=0
    _
  %s10 = ssub.s32 1, %s8
  %s11 = scalar_select 0, %s10, %s8
  $region1: #{mlp_forward.1} parent=0
    #allocation2 [shape = 'u8[32768]{0}', space=vmem, size = 0x8000, scoped, tag = 'input window, operand 0']
    #allocation3 [shape = 'u8[32768]{0}', space=vmem, size = 0x8000, scoped, tag = 'output window, operand 0']
    #allocation4 [shape = 's32[2]{0}', space=sflag, size = 0x8, scoped, tag = 'scoped memory for mlp_forward.1']
    %12 = vsyncpa [#allocation4], 0
    %s13 = scalar_lea.sflag [#allocation4], 1
    %14 = vsyncpa %s13, 0
    loop: start=0, step=1, limit=6
    $region2: #{mlp_forward.1} parent=1 // loop_pre_header
      _
    $region3: #{mlp_forward.1} parent=1 // loop_header
      %s16 = sphi 0, %s20
      %p17 = scmp.ge.s32.totalorder %s16, 6
      %s23 = sphi 0, %s35
      %s24 = sphi 0, %s31
      %s25 = sphi 0, %s23
      %s26 = sphi 0, %s24
      %s27 = sphi 0, %s25
      %s28 = sphi 0, %s26
      %s40 = sphi 0, %s42
      %s43 = sphi 0, %s40
      %s44 = sphi 0, %s43
      %s60 = sphi 0, %s44
      %s64 = sphi 0, %s64
      %s66 = sphi 0, %s64
      %s67 = sphi 0, %s66
      %s81 = sphi 0, %s67
      %s85 = sphi 0, %s85
      %s87 = sphi 0, %s85
      %s88 = sphi 0, %s87
      %s102 = sphi 0, %s88
      %s106 = sphi 0, %s106
      %s108 = sphi 0, %s106
      %s109 = sphi 0, %s108
      %s123 = sphi 0, %s109
      %s127 = sphi 0, %s127
      %s129 = sphi 0, %s127
      %s130 = sphi 0, %s129
      %s144 = sphi 0, %s130
      %s148 = sphi 0, %s148
      %s150 = sphi 0, %s148
      %s151 = sphi 0, %s150
      %s165 = sphi 0, %s151
      %s169 = sphi 0, %s169
      %s171 = sphi 0, %s169
      %s172 = sphi 0, %s171
      %s186 = sphi 0, %s172
      %s194 = sphi 0, %s196
      %s197 = sphi 0, %s194
      %s198 = sphi 0, %s197
      %s214 = sphi 0, %s198
    $region4: #{mlp_forward.1} parent=1 // loop_header_branch
      %19 = sbr.rel (%p17) target = $region8
    $region5: #{mlp_forward.1} parent=1 // loop_body
      %s21 = ssub.s32 %s16, 1
      %s22 = ssub.s32 %s16, 2
      %s29 = sadd.s32 1, %s24
      %p30 = scmp.ge.s32.totalorder %s29, 2
      %s31 = scalar_select %p30, 0, %s29
      %s32 = sadd.s32 1, %s23
      %s33 = scalar_select %p30, %s32, %s23
      %p34 = scmp.ge.s32.totalorder %s33, 2
      %s35 = scalar_select %p34, 0, %s33
      %s36 = ssub.s32 %s23, %s35
      %s37 = ssub.s32 %s24, %s31
      %s38 = sor.u32 %s36, %s37
      %p39 = scmp.eq.s32.totalorder %s38, 0
      %s41 = sadd.s32 %s40, 1
      %s42 = scalar_select %p39, %s40, %s41
      %p45 = pneg %p39
      %p46 = scmp.eq.s32.totalorder %s16, 3
      %p47 = por %p45, %p46
      %p48 = scmp.ne.s32.totalorder %s40, %s43
      %p49 = scmp.eq.s32.totalorder %s16, 0
      %p50 = por %p48, %p49
      %p51 = scmp.ne.s32.totalorder %s40, %s43
      %p52 = scmp.eq.s32.totalorder %s21, 3
      %p53 = por %p51, %p52
      %p54 = scmp.ne.s32.totalorder %s43, %s44
      %p55 = scmp.eq.s32.totalorder %s21, 0
      %p56 = por %p54, %p55
      %p57 = scmp.ne.s32.totalorder %s43, %s44
      %p58 = scmp.eq.s32.totalorder %s22, 3
      %p59 = por %p57, %p58
      %p61 = scmp.ne.s32.totalorder %s44, %s60
      %p62 = scmp.eq.s32.totalorder %s22, 0
      %p63 = por %p61, %p62
      %s65 = sadd.s32 %s64, 1
      %p68 = scmp.eq.s32.totalorder %s16, 3
      %p69 = scmp.ne.s32.totalorder %s64, %s66
      %p70 = scmp.eq.s32.totalorder %s16, 0
      %p71 = por %p69, %p70
      %p72 = scmp.ne.s32.totalorder %s64, %s66
      %p73 = scmp.eq.s32.totalorder %s21, 3
      %p74 = por %p72, %p73
      %p75 = scmp.ne.s32.totalorder %s66, %s67
      %p76 = scmp.eq.s32.totalorder %s21, 0
      %p77 = por %p75, %p76
      %p78 = scmp.ne.s32.totalorder %s66, %s67
      %p79 = scmp.eq.s32.totalorder %s22, 3
      %p80 = por %p78, %p79
      %p82 = scmp.ne.s32.totalorder %s67, %s81
      %p83 = scmp.eq.s32.totalorder %s22, 0
      %p84 = por %p82, %p83
      %s86 = sadd.s32 %s85, 1
      %p89 = scmp.eq.s32.totalorder %s16, 3
      %p90 = scmp.ne.s32.totalorder %s85, %s87
      %p91 = scmp.eq.s32.totalorder %s16, 0
      %p92 = por %p90, %p91
      %p93 = scmp.ne.s32.totalorder %s85, %s87
      %p94 = scmp.eq.s32.totalorder %s21, 3
      %p95 = por %p93, %p94
      %p96 = scmp.ne.s32.totalorder %s87, %s88
      %p97 = scmp.eq.s32.totalorder %s21, 0
      %p98 = por %p96, %p97
      %p99 = scmp.ne.s32.totalorder %s87, %s88
      %p100 = scmp.eq.s32.totalorder %s22, 3
      %p101 = por %p99, %p100
      %p103 = scmp.ne.s32.totalorder %s88, %s102
      %p104 = scmp.eq.s32.totalorder %s22, 0
      %p105 = por %p103, %p104
      %s107 = sadd.s32 %s106, 1
      %p110 = scmp.eq.s32.totalorder %s16, 3
      %p111 = scmp.ne.s32.totalorder %s106, %s108
      %p112 = scmp.eq.s32.totalorder %s16, 0
      %p113 = por %p111, %p112
      %p114 = scmp.ne.s32.totalorder %s106, %s108
      %p115 = scmp.eq.s32.totalorder %s21, 3
      %p116 = por %p114, %p115
      %p117 = scmp.ne.s32.totalorder %s108, %s109
      %p118 = scmp.eq.s32.totalorder %s21, 0
      %p119 = por %p117, %p118
      %p120 = scmp.ne.s32.totalorder %s108, %s109
      %p121 = scmp.eq.s32.totalorder %s22, 3
      %p122 = por %p120, %p121
      %p124 = scmp.ne.s32.totalorder %s109, %s123
      %p125 = scmp.eq.s32.totalorder %s22, 0
      %p126 = por %p124, %p125
      %s128 = sadd.s32 %s127, 1
      %p131 = scmp.eq.s32.totalorder %s16, 3
      %p132 = scmp.ne.s32.totalorder %s127, %s129
      %p133 = scmp.eq.s32.totalorder %s16, 0
      %p134 = por %p132, %p133
      %p135 = scmp.ne.s32.totalorder %s127, %s129
      %p136 = scmp.eq.s32.totalorder %s21, 3
      %p137 = por %p135, %p136
      %p138 = scmp.ne.s32.totalorder %s129, %s130
      %p139 = scmp.eq.s32.totalorder %s21, 0
      %p140 = por %p138, %p139
      %p141 = scmp.ne.s32.totalorder %s129, %s130
      %p142 = scmp.eq.s32.totalorder %s22, 3
      %p143 = por %p141, %p142
      %p145 = scmp.ne.s32.totalorder %s130, %s144
      %p146 = scmp.eq.s32.totalorder %s22, 0
      %p147 = por %p145, %p146
      %s149 = sadd.s32 %s148, 1
      %p152 = scmp.eq.s32.totalorder %s16, 3
      %p153 = scmp.ne.s32.totalorder %s148, %s150
      %p154 = scmp.eq.s32.totalorder %s16, 0
      %p155 = por %p153, %p154
      %p156 = scmp.ne.s32.totalorder %s148, %s150
      %p157 = scmp.eq.s32.totalorder %s21, 3
      %p158 = por %p156, %p157
      %p159 = scmp.ne.s32.totalorder %s150, %s151
      %p160 = scmp.eq.s32.totalorder %s21, 0
      %p161 = por %p159, %p160
      %p162 = scmp.ne.s32.totalorder %s150, %s151
      %p163 = scmp.eq.s32.totalorder %s22, 3
      %p164 = por %p162, %p163
      %p166 = scmp.ne.s32.totalorder %s151, %s165
      %p167 = scmp.eq.s32.totalorder %s22, 0
      %p168 = por %p166, %p167
      %s170 = sadd.s32 %s169, 1
      %p173 = scmp.eq.s32.totalorder %s16, 3
      %p174 = scmp.ne.s32.totalorder %s169, %s171
      %p175 = scmp.eq.s32.totalorder %s16, 0
      %p176 = por %p174, %p175
      %p177 = scmp.ne.s32.totalorder %s169, %s171
      %p178 = scmp.eq.s32.totalorder %s21, 3
      %p179 = por %p177, %p178
      %p180 = scmp.ne.s32.totalorder %s171, %s172
      %p181 = scmp.eq.s32.totalorder %s21, 0
      %p182 = por %p180, %p181
      %p183 = scmp.ne.s32.totalorder %s171, %s172
      %p184 = scmp.eq.s32.totalorder %s22, 3
      %p185 = por %p183, %p184
      %p187 = scmp.ne.s32.totalorder %s172, %s186
      %p188 = scmp.eq.s32.totalorder %s22, 0
      %p189 = por %p187, %p188
      %s190 = ssub.s32 %s23, %s35
      %s191 = ssub.s32 %s24, %s31
      %s192 = sor.u32 %s190, %s191
      %p193 = scmp.eq.s32.totalorder %s192, 0
      %s195 = sadd.s32 %s194, 1
      %s196 = scalar_select %p193, %s194, %s195
      %p199 = pneg %p193
      %p200 = scmp.eq.s32.totalorder %s16, 3
      %p201 = por %p199, %p200
      %p202 = scmp.ne.s32.totalorder %s194, %s197
      %p203 = scmp.eq.s32.totalorder %s16, 0
      %p204 = por %p202, %p203
      %p205 = scmp.ne.s32.totalorder %s194, %s197
      %p206 = scmp.eq.s32.totalorder %s21, 3
      %p207 = por %p205, %p206
      %p208 = scmp.ne.s32.totalorder %s197, %s198
      %p209 = scmp.eq.s32.totalorder %s21, 0
      %p210 = por %p208, %p209
      %p211 = scmp.ne.s32.totalorder %s197, %s198
      %p212 = scmp.eq.s32.totalorder %s22, 3
      %p213 = por %p211, %p212
      %p215 = scmp.ne.s32.totalorder %s198, %s214
      %p216 = scmp.eq.s32.totalorder %s22, 0
      %p217 = por %p215, %p216
      %p218 = scmp.le.s32.totalorder 1, %s16
      %p219 = scmp.lt.s32.totalorder %s16, 5
      %p220 = pnand %p218, %p219
      %p221 = pneg %p220
      // Predicated region
      $region9: #{mlp_forward.1} parent=5 // pred_check
        _
      $region10: #{mlp_forward.1} parent=5 // pred_check_branch
        %223 = sbr.rel (%p220) target = $region12
      $region11: #{mlp_forward.1} parent=5 // pred_region
        %s224 = ssub.s32 %s16, 1
        // Predicated region
        $region13: #{mlp_forward.1} parent=11 // pred_check
          %p225 = pneg %p77
        $region14: #{mlp_forward.1} parent=11 // pred_check_branch
          %227 = sbr.rel (%p225) target = $region16
        $region15: #{mlp_forward.1} parent=11 // pred_region
          _
        $region16: #{mlp_forward.1} parent=11 // pred_fallthru
          _
        // Predicated region
        $region17: #{mlp_forward.1} parent=11 // pred_check
          %p228 = pneg %p98
        $region18: #{mlp_forward.1} parent=11 // pred_check_branch
          %230 = sbr.rel (%p228) target = $region20
        $region19: #{mlp_forward.1} parent=11 // pred_region
          _
        $region20: #{mlp_forward.1} parent=11 // pred_fallthru
          _
        // Predicated region
        $region21: #{mlp_forward.1} parent=11 // pred_check
          %p231 = pneg %p119
        $region22: #{mlp_forward.1} parent=11 // pred_check_branch
          %233 = sbr.rel (%p231) target = $region24
        $region23: #{mlp_forward.1} parent=11 // pred_region
          _
        $region24: #{mlp_forward.1} parent=11 // pred_fallthru
          _
        // Predicated region
        $region25: #{mlp_forward.1} parent=11 // pred_check
          %p234 = pneg %p140
        $region26: #{mlp_forward.1} parent=11 // pred_check_branch
          %236 = sbr.rel (%p234) target = $region28
        $region27: #{mlp_forward.1} parent=11 // pred_region
          _
        $region28: #{mlp_forward.1} parent=11 // pred_fallthru
          _
        // Predicated region
        $region29: #{mlp_forward.1} parent=11 // pred_check
          %p237 = pneg %p161
        $region30: #{mlp_forward.1} parent=11 // pred_check_branch
          %239 = sbr.rel (%p237) target = $region32
        $region31: #{mlp_forward.1} parent=11 // pred_region
          _
        $region32: #{mlp_forward.1} parent=11 // pred_fallthru
          _
        // Predicated region
        $region33: #{mlp_forward.1} parent=11 // pred_check
          %p240 = pneg %p182
        $region34: #{mlp_forward.1} parent=11 // pred_check_branch
          %242 = sbr.rel (%p240) target = $region36
        $region35: #{mlp_forward.1} parent=11 // pred_region
          _
        $region36: #{mlp_forward.1} parent=11 // pred_fallthru
          _
      $region12: #{mlp_forward.1} parent=5 // pred_fallthru
        _
      %p243 = scmp.lt.s32.totalorder %s16, 4
      // Predicated region
      $region37: #{mlp_forward.1} parent=5 // pred_check
        %p244 = pneg %p243
      $region38: #{mlp_forward.1} parent=5 // pred_check_branch
        %246 = sbr.rel (%p244) target = $region40
      $region39: #{mlp_forward.1} parent=5 // pred_region
        // Predicated region
        $region41: #{mlp_forward.1} parent=39 // pred_check
          %p247 = pneg %p50
        $region42: #{mlp_forward.1} parent=39 // pred_check_branch
          %249 = sbr.rel (%p247) target = $region44
        $region43: #{mlp_forward.1} parent=39 // pred_region
          %s250 = sand.u32 %s40, 1
          %s251 = sand.u32 %s40, 1
          %s252 = smul.addr %s251, 32
          %s253 = scalar_lea.vmem [#allocation2], %s252
          %s254 = smul.u32 2, %s24
          %s255 = ssub.s32 3, %s254
          %p256 = scmp.lt.s32.totalorder %s255, 2
          %s257 = scalar_select %p256, %s255, 2
          %s258 = smul.u32 16, %s257
          %p259 = scmp.ne.s32.totalorder 0, %s258
          %s260 = smul.addr %s23, 6
          %s261 = sadd.s32 %s254, %s260
          %s262 = smul.addr %s261, 8
          %s263 = scalar_lea.vmem %s0, %s262
          %s264 = smul.u32 %s257, 8
          // Predicated region
          $region45: #{mlp_forward.1} parent=43 // pred_check
            %p265 = pneg %p259
          $region46: #{mlp_forward.1} parent=43 // pred_check_branch
            %267 = sbr.rel (%p265) target = $region48
          $region47: #{mlp_forward.1} parent=43 // pred_region
            %p268 = scmp.lt.u32.totalorder %s264, 8
            %p269 = pneg %p268
            // Predicated region
            $region49: #{mlp_forward.1} parent=47 // pred_check
              _
            $region50: #{mlp_forward.1} parent=47 // pred_check_branch
              %271 = sbr.rel (%p268) target = $region52
            $region51: #{mlp_forward.1} parent=47 // pred_region
              %s289 = sand.u32 %s264, 7
              %p290 = scmp.eq.s32.totalorder %s289, 0
              // Predicated region
              $region64: #{mlp_forward.1} parent=51 // pred_check
                %p291 = pneg %p290
              $region65: #{mlp_forward.1} parent=51 // pred_check_branch
                %293 = sbr.rel (%p291) target = $region67
              $region66: #{mlp_forward.1} parent=51 // pred_region
                %s294 = sshrl.u32 %s264, 3
                %s295 = sshrl.u32 %s294, 4
                // While loop
                $region68: #{mlp_forward.1} parent=66 // loop_pre_header
                  _
                $region69: #{mlp_forward.1} parent=66 // loop_header
                  %s297 = sphi 0, %s299
                  %p298 = scmp.ge.s32.totalorder %s297, %s295
                  %s302 = sphi 0, %s371
                  %s303 = sphi %s263, %s374
                  %s304 = sphi %s253, %s375
                $region70: #{mlp_forward.1} parent=66 // loop_header_branch
                  %301 = sbr.rel (%p298) target = $region74
                $region71: #{mlp_forward.1} parent=66 // loop_body
                  %v305 = vld [vmem:[%s303] sm:$0xff]
                  %306 = vst [vmem:[%s304] sm:$0xff] %v305
                  %v307 = vld [vmem:[%s303 + $0x8] sm:$0xff]
                  %308 = vst [vmem:[%s304 + $0x8] sm:$0xff] %v307
                  %v309 = vld [vmem:[%s303 + $0x10] sm:$0xff]
                  %310 = vst [vmem:[%s304 + $0x10] sm:$0xff] %v309
                  %v311 = vld [vmem:[%s303 + $0x18] sm:$0xff]
                  %312 = vst [vmem:[%s304 + $0x18] sm:$0xff] %v311
                  %v313 = vld [vmem:[%s303 + $0x20] sm:$0xff]
                  %314 = vst [vmem:[%s304 + $0x20] sm:$0xff] %v313
                  %v315 = vld [vmem:[%s303 + $0x28] sm:$0xff]
                  %316 = vst [vmem:[%s304 + $0x28] sm:$0xff] %v315
                  %v317 = vld [vmem:[%s303 + $0x30] sm:$0xff]
                  %318 = vst [vmem:[%s304 + $0x30] sm:$0xff] %v317
                  %v319 = vld [vmem:[%s303 + $0x38] sm:$0xff]
                  %320 = vst [vmem:[%s304 + $0x38] sm:$0xff] %v319
                  %v321 = vld [vmem:[%s303 + $0x40] sm:$0xff]
                  %322 = vst [vmem:[%s304 + $0x40] sm:$0xff] %v321
                  %v323 = vld [vmem:[%s303 + $0x48] sm:$0xff]
                  %324 = vst [vmem:[%s304 + $0x48] sm:$0xff] %v323
                  %v325 = vld [vmem:[%s303 + $0x50] sm:$0xff]
                  %326 = vst [vmem:[%s304 + $0x50] sm:$0xff] %v325
                  %v327 = vld [vmem:[%s303 + $0x58] sm:$0xff]
                  %328 = vst [vmem:[%s304 + $0x58] sm:$0xff] %v327
                  %v329 = vld [vmem:[%s303 + $0x60] sm:$0xff]
                  %330 = vst [vmem:[%s304 + $0x60] sm:$0xff] %v329
                  %v331 = vld [vmem:[%s303 + $0x68] sm:$0xff]
                  %332 = vst [vmem:[%s304 + $0x68] sm:$0xff] %v331
                  %v333 = vld [vmem:[%s303 + $0x70] sm:$0xff]
                  %334 = vst [vmem:[%s304 + $0x70] sm:$0xff] %v333
                  %v335 = vld [vmem:[%s303 + $0x78] sm:$0xff]
                  %336 = vst [vmem:[%s304 + $0x78] sm:$0xff] %v335
                  %v337 = vld [vmem:[%s303 + $0x18] sm:$0xff]
                  %338 = vst [vmem:[%s304 + $0x10] sm:$0xff] %v337
                  %v339 = vld [vmem:[%s303 + $0x20] sm:$0xff]
                  %340 = vst [vmem:[%s304 + $0x18] sm:$0xff] %v339
                  %v341 = vld [vmem:[%s303 + $0x28] sm:$0xff]
                  %342 = vst [vmem:[%s304 + $0x20] sm:$0xff] %v341
                  %v343 = vld [vmem:[%s303 + $0x30] sm:$0xff]
                  %344 = vst [vmem:[%s304 + $0x28] sm:$0xff] %v343
                  %v345 = vld [vmem:[%s303 + $0x38] sm:$0xff]
                  %346 = vst [vmem:[%s304 + $0x30] sm:$0xff] %v345
                  %v347 = vld [vmem:[%s303 + $0x40] sm:$0xff]
                  %348 = vst [vmem:[%s304 + $0x38] sm:$0xff] %v347
                  %v349 = vld [vmem:[%s303 + $0x48] sm:$0xff]
                  %350 = vst [vmem:[%s304 + $0x40] sm:$0xff] %v349
                  %v351 = vld [vmem:[%s303 + $0x50] sm:$0xff]
                  %352 = vst [vmem:[%s304 + $0x48] sm:$0xff] %v351
                  %v353 = vld [vmem:[%s303 + $0x58] sm:$0xff]
                  %354 = vst [vmem:[%s304 + $0x50] sm:$0xff] %v353
                  %v355 = vld [vmem:[%s303 + $0x60] sm:$0xff]
                  %356 = vst [vmem:[%s304 + $0x58] sm:$0xff] %v355
                  %v357 = vld [vmem:[%s303 + $0x68] sm:$0xff]
                  %358 = vst [vmem:[%s304 + $0x60] sm:$0xff] %v357
                  %v359 = vld [vmem:[%s303 + $0x70] sm:$0xff]
                  %360 = vst [vmem:[%s304 + $0x68] sm:$0xff] %v359
                  %v361 = vld [vmem:[%s303 + $0x78] sm:$0xff]
                  %362 = vst [vmem:[%s304 + $0x70] sm:$0xff] %v361
                  %v363 = vld [vmem:[%s303 + $0x80] sm:$0xff]
                  %364 = vst [vmem:[%s304 + $0x78] sm:$0xff] %v363
                  %v365 = vld [vmem:[%s303 + $0x88] sm:$0xff]
                  %366 = vst [vmem:[%s304 + $0x80] sm:$0xff] %v365
                  %v367 = vld [vmem:[%s303 + $0x90] sm:$0xff]
                  %368 = vst [vmem:[%s304 + $0x88] sm:$0xff] %v367
                  %s369 = sadd.s32 1, %s302
                  %p370 = scmp.ge.s32.totalorder %s369, %s295
                  %s371 = scalar_select %p370, 0, %s369
                  %s372 = smul.u32 %s371, 128
                  %s373 = smul.u32 %s371, 128
                  %s374 = scalar_lea.vmem %s263, %s372
                  %s375 = scalar_lea.vmem %s253, %s373 [#allocation2]
                $region72: #{mlp_forward.1} parent=66 // loop_footer
                  %s299 = sadd.s32 %s297, 1
                $region73: #{mlp_forward.1} parent=66 // loop_footer_branch
                  %296 = sbr.rel target = $region69
                $region74: #{mlp_forward.1} parent=66 // loop_exit
                  _
                %s376 = sshrl.u32 %s294, 4
                %s377 = sand.u32 %s294, 15
                %s378 = smul.u32 %s376, 16
                %s379 = smul.u32 8, %s378
                %s380 = scalar_lea.vmem %s263, %s379
                %s381 = smul.u32 8, %s378
                %s382 = scalar_lea.vmem %s253, %s381 [#allocation2]
                // While loop
                $region75: #{mlp_forward.1} parent=66 // loop_pre_header
                  _
                $region76: #{mlp_forward.1} parent=66 // loop_header
                  %s384 = sphi 0, %s386
                  %p385 = scmp.ge.s32.totalorder %s384, %s377
                  %s389 = sphi 0, %s398
                  %s390 = sphi %s380, %s401
                  %s391 = sphi %s382, %s402
                $region77: #{mlp_forward.1} parent=66 // loop_header_branch
                  %388 = sbr.rel (%p385) target = $region81
                $region78: #{mlp_forward.1} parent=66 // loop_body
                  %v392 = vld [vmem:[%s390] sm:$0xff]
                  %393 = vst [vmem:[%s391] sm:$0xff] %v392
                  %v394 = vld [vmem:[%s390 + $0x18] sm:$0xff]
                  %395 = vst [vmem:[%s391 + $0x10] sm:$0xff] %v394
                  %s396 = sadd.s32 1, %s389
                  %p397 = scmp.ge.s32.totalorder %s396, %s377
                  %s398 = scalar_select %p397, 0, %s396
                  %s399 = smul.u32 %s398, 8
                  %s400 = smul.u32 %s398, 8
                  %s401 = scalar_lea.vmem %s380, %s399
                  %s402 = scalar_lea.vmem %s382, %s400 [#allocation2]
                $region79: #{mlp_forward.1} parent=66 // loop_footer
                  %s386 = sadd.s32 %s384, 1
                $region80: #{mlp_forward.1} parent=66 // loop_footer_branch
                  %383 = sbr.rel target = $region76
                $region81: #{mlp_forward.1} parent=66 // loop_exit
                  _
              $region67: #{mlp_forward.1} parent=51 // pred_fallthru
                _
              %p403 = pneg %p290
              // Predicated region
              $region82: #{mlp_forward.1} parent=51 // pred_check
                _
              $region83: #{mlp_forward.1} parent=51 // pred_check_branch
                %405 = sbr.rel (%p290) target = $region85
              $region84: #{mlp_forward.1} parent=51 // pred_region
                %s406 = sand.u32 %s264, 7
                %s407 = ssub.s32 %s264, %s406
                %s408 = scalar_lea.vmem %s263, %s407
                %s409 = ssub.s32 %s264, %s406
                %s410 = scalar_lea.vmem %s253, %s409 [#allocation2]
                %s411 = sshrl.u32 %s264, 3
                %s412 = sshrl.u32 %s411, 4
                // While loop
                $region86: #{mlp_forward.1} parent=84 // loop_pre_header
                  _
                $region87: #{mlp_forward.1} parent=84 // loop_header
                  %s414 = sphi 0, %s416
                  %p415 = scmp.ge.s32.totalorder %s414, %s412
                  %s419 = sphi 0, %s488
                  %s420 = sphi %s263, %s491
                  %s421 = sphi %s253, %s492
                $region88: #{mlp_forward.1} parent=84 // loop_header_branch
                  %418 = sbr.rel (%p415) target = $region92
                $region89: #{mlp_forward.1} parent=84 // loop_body
                  %v422 = vld [vmem:[%s420] sm:$0xff]
                  %423 = vst [vmem:[%s421] sm:$0xff] %v422
                  %v424 = vld [vmem:[%s420 + $0x8] sm:$0xff]
                  %425 = vst [vmem:[%s421 + $0x8] sm:$0xff] %v424
                  %v426 = vld [vmem:[%s420 + $0x10] sm:$0xff]
                  %427 = vst [vmem:[%s421 + $0x10] sm:$0xff] %v426
                  %v428 = vld [vmem:[%s420 + $0x18] sm:$0xff]
                  %429 = vst [vmem:[%s421 + $0x18] sm:$0xff] %v428
                  %v430 = vld [vmem:[%s420 + $0x20] sm:$0xff]
                  %431 = vst [vmem:[%s421 + $0x20] sm:$0xff] %v430
                  %v432 = vld [vmem:[%s420 + $0x28] sm:$0xff]
                  %433 = vst [vmem:[%s421 + $0x28] sm:$0xff] %v432
                  %v434 = vld [vmem:[%s420 + $0x30] sm:$0xff]
                  %435 = vst [vmem:[%s421 + $0x30] sm:$0xff] %v434
                  %v436 = vld [vmem:[%s420 + $0x38] sm:$0xff]
                  %437 = vst [vmem:[%s421 + $0x38] sm:$0xff] %v436
                  %v438 = vld [vmem:[%s420 + $0x40] sm:$0xff]
                  %439 = vst [vmem:[%s421 + $0x40] sm:$0xff] %v438
                  %v440 = vld [vmem:[%s420 + $0x48] sm:$0xff]
                  %441 = vst [vmem:[%s421 + $0x48] sm:$0xff] %v440
                  %v442 = vld [vmem:[%s420 + $0x50] sm:$0xff]
                  %443 = vst [vmem:[%s421 + $0x50] sm:$0xff] %v442
                  %v444 = vld [vmem:[%s420 + $0x58] sm:$0xff]
                  %445 = vst [vmem:[%s421 + $0x58] sm:$0xff] %v444
                  %v446 = vld [vmem:[%s420 + $0x60] sm:$0xff]
                  %447 = vst [vmem:[%s421 + $0x60] sm:$0xff] %v446
                  %v448 = vld [vmem:[%s420 + $0x68] sm:$0xff]
                  %449 = vst [vmem:[%s421 + $0x68] sm:$0xff] %v448
                  %v450 = vld [vmem:[%s420 + $0x70] sm:$0xff]
                  %451 = vst [vmem:[%s421 + $0x70] sm:$0xff] %v450
                  %v452 = vld [vmem:[%s420 + $0x78] sm:$0xff]
                  %453 = vst [vmem:[%s421 + $0x78] sm:$0xff] %v452
                  %v454 = vld [vmem:[%s420 + $0x18] sm:$0xff]
                  %455 = vst [vmem:[%s421 + $0x10] sm:$0xff] %v454
                  %v456 = vld [vmem:[%s420 + $0x20] sm:$0xff]
                  %457 = vst [vmem:[%s421 + $0x18] sm:$0xff] %v456
                  %v458 = vld [vmem:[%s420 + $0x28] sm:$0xff]
                  %459 = vst [vmem:[%s421 + $0x20] sm:$0xff] %v458
                  %v460 = vld [vmem:[%s420 + $0x30] sm:$0xff]
                  %461 = vst [vmem:[%s421 + $0x28] sm:$0xff] %v460
                  %v462 = vld [vmem:[%s420 + $0x38] sm:$0xff]
                  %463 = vst [vmem:[%s421 + $0x30] sm:$0xff] %v462
                  %v464 = vld [vmem:[%s420 + $0x40] sm:$0xff]
                  %465 = vst [vmem:[%s421 + $0x38] sm:$0xff] %v464
                  %v466 = vld [vmem:[%s420 + $0x48] sm:$0xff]
                  %467 = vst [vmem:[%s421 + $0x40] sm:$0xff] %v466
                  %v468 = vld [vmem:[%s420 + $0x50] sm:$0xff]
                  %469 = vst [vmem:[%s421 + $0x48] sm:$0xff] %v468
                  %v470 = vld [vmem:[%s420 + $0x58] sm:$0xff]
                  %471 = vst [vmem:[%s421 + $0x50] sm:$0xff] %v470
                  %v472 = vld [vmem:[%s420 + $0x60] sm:$0xff]
                  %473 = vst [vmem:[%s421 + $0x58] sm:$0xff] %v472
                  %v474 = vld [vmem:[%s420 + $0x68] sm:$0xff]
                  %475 = vst [vmem:[%s421 + $0x60] sm:$0xff] %v474
                  %v476 = vld [vmem:[%s420 + $0x70] sm:$0xff]
                  %477 = vst [vmem:[%s421 + $0x68] sm:$0xff] %v476
                  %v478 = vld [vmem:[%s420 + $0x78] sm:$0xff]
                  %479 = vst [vmem:[%s421 + $0x70] sm:$0xff] %v478
                  %v480 = vld [vmem:[%s420 + $0x80] sm:$0xff]
                  %481 = vst [vmem:[%s421 + $0x78] sm:$0xff] %v480
                  %v482 = vld [vmem:[%s420 + $0x88] sm:$0xff]
                  %483 = vst [vmem:[%s421 + $0x80] sm:$0xff] %v482
                  %v484 = vld [vmem:[%s420 + $0x90] sm:$0xff]
                  %485 = vst [vmem:[%s421 + $0x88] sm:$0xff] %v484
                  %s486 = sadd.s32 1, %s419
                  %p487 = scmp.ge.s32.totalorder %s486, %s412
                  %s488 = scalar_select %p487, 0, %s486
                  %s489 = smul.u32 %s488, 128
                  %s490 = smul.u32 %s488, 128
                  %s491 = scalar_lea.vmem %s263, %s489
                  %s492 = scalar_lea.vmem %s253, %s490 [#allocation2]
                $region90: #{mlp_forward.1} parent=84 // loop_footer
                  %s416 = sadd.s32 %s414, 1
                $region91: #{mlp_forward.1} parent=84 // loop_footer_branch
                  %413 = sbr.rel target = $region87
                $region92: #{mlp_forward.1} parent=84 // loop_exit
                  _
                %s493 = sshrl.u32 %s411, 4
                %s494 = sand.u32 %s411, 15
                %s495 = smul.u32 %s493, 16
                %s496 = smul.u32 8, %s495
                %s497 = scalar_lea.vmem %s263, %s496
                %s498 = smul.u32 8, %s495
                %s499 = scalar_lea.vmem %s253, %s498 [#allocation2]
                // While loop
                $region93: #{mlp_forward.1} parent=84 // loop_pre_header
                  _
                $region94: #{mlp_forward.1} parent=84 // loop_header
                  %s501 = sphi 0, %s503
                  %p502 = scmp.ge.s32.totalorder %s501, %s494
                  %s506 = sphi 0, %s515
                  %s507 = sphi %s497, %s518
                  %s508 = sphi %s499, %s519
                $region95: #{mlp_forward.1} parent=84 // loop_header_branch
                  %505 = sbr.rel (%p502) target = $region99
                $region96: #{mlp_forward.1} parent=84 // loop_body
                  %v509 = vld [vmem:[%s507] sm:$0xff]
                  %510 = vst [vmem:[%s508] sm:$0xff] %v509
                  %v511 = vld [vmem:[%s507 + $0x18] sm:$0xff]
                  %512 = vst [vmem:[%s508 + $0x10] sm:$0xff] %v511
                  %s513 = sadd.s32 1, %s506
                  %p514 = scmp.ge.s32.totalorder %s513, %s494
                  %s515 = scalar_select %p514, 0, %s513
                  %s516 = smul.u32 %s515, 8
                  %s517 = smul.u32 %s515, 8
                  %s518 = scalar_lea.vmem %s497, %s516
                  %s519 = scalar_lea.vmem %s499, %s517 [#allocation2]
                $region97: #{mlp_forward.1} parent=84 // loop_footer
                  %s503 = sadd.s32 %s501, 1
                $region98: #{mlp_forward.1} parent=84 // loop_footer_branch
                  %500 = sbr.rel target = $region94
                $region99: #{mlp_forward.1} parent=84 // loop_exit
                  _
                %s520 = sshll.u32 1, %s406
                %s521 = ssub.s32 %s520, 1
                loop: start=0, step=1, limit=1
                $region100: #{mlp_forward.1} parent=84 // loop_pre_header
                  _
                $region101: #{mlp_forward.1} parent=84 // loop_header
                  %s523 = sphi 0, %s527
                  %p524 = scmp.ge.s32.totalorder %s523, 1
                  %s528 = sphi %s408, %s408
                  %s529 = sphi %s410, %s410
                $region102: #{mlp_forward.1} parent=84 // loop_header_branch
                  %526 = sbr.rel (%p524) target = $region106
                $region103: #{mlp_forward.1} parent=84 // loop_body
                  %v530 = vld [vmem:[%s528] sm:%s521]
                  %531 = vst [vmem:[%s529] sm:%s521] %v530
                  %v532 = vld [vmem:[%s528 + $0x18] sm:%s521]
                  %533 = vst [vmem:[%s529 + $0x10] sm:%s521] %v532
                $region104: #{mlp_forward.1} parent=84 // loop_footer
                  %s527 = sadd.s32 1, %s523
                $region105: #{mlp_forward.1} parent=84 // loop_footer_branch
                  %522 = sbr.rel target = $region101
                $region106: #{mlp_forward.1} parent=84 // loop_exit
                  _
              $region85: #{mlp_forward.1} parent=51 // pred_fallthru
                _
            $region52: #{mlp_forward.1} parent=47 // pred_fallthru
              _
            // Predicated region
            $region53: #{mlp_forward.1} parent=47 // pred_check
              %p272 = pneg %p268
            $region54: #{mlp_forward.1} parent=47 // pred_check_branch
              %274 = sbr.rel (%p272) target = $region56
            $region55: #{mlp_forward.1} parent=47 // pred_region
              %s275 = sshll.u32 1, %s264
              %s276 = ssub.s32 %s275, 1
              loop: start=0, step=1, limit=1
              $region57: #{mlp_forward.1} parent=55 // loop_pre_header
                _
              $region58: #{mlp_forward.1} parent=55 // loop_header
                %s278 = sphi 0, %s282
                %p279 = scmp.ge.s32.totalorder %s278, 1
                %s283 = sphi %s263, %s263
                %s284 = sphi %s253, %s253
              $region59: #{mlp_forward.1} parent=55 // loop_header_branch
                %281 = sbr.rel (%p279) target = $region63
              $region60: #{mlp_forward.1} parent=55 // loop_body
                %v285 = vld [vmem:[%s283] sm:%s276]
                %286 = vst [vmem:[%s284] sm:%s276] %v285
                %v287 = vld [vmem:[%s283 + $0x18] sm:%s276]
                %288 = vst [vmem:[%s284 + $0x10] sm:%s276] %v287
              $region61: #{mlp_forward.1} parent=55 // loop_footer
                %s282 = sadd.s32 1, %s278
              $region62: #{mlp_forward.1} parent=55 // loop_footer_branch
                %277 = sbr.rel target = $region58
              $region63: #{mlp_forward.1} parent=55 // loop_exit
                _
            $region56: #{mlp_forward.1} parent=47 // pred_fallthru
              _
          $region48: #{mlp_forward.1} parent=43 // pred_fallthru
            _
          %534 = vnop
        $region44: #{mlp_forward.1} parent=39 // pred_fallthru
          _
      $region40: #{mlp_forward.1} parent=5 // pred_fallthru
        _
      %p535 = scmp.le.s32.totalorder 1, %s16
      %p536 = scmp.lt.s32.totalorder %s16, 5
      %p537 = pnand %p535, %p536
      %p538 = pneg %p537
      // Predicated region
      $region107: #{mlp_forward.1} parent=5 // pred_check
        _
      $region108: #{mlp_forward.1} parent=5 // pred_check_branch
        %540 = sbr.rel (%p537) target = $region110
      $region109: #{mlp_forward.1} parent=5 // pred_region
        %s541 = ssub.s32 %s16, 1
        %s542 = sand.u32 %s43, 1
        %s543 = sand.u32 %s43, 1
        %s544 = smul.addr %s543, 32
        %s545 = scalar_lea.vmem [#allocation2], %s544
        // Predicated region
        $region111: #{mlp_forward.1} parent=109 // pred_check
          %p546 = pneg %p56
        $region112: #{mlp_forward.1} parent=109 // pred_check_branch
          %548 = sbr.rel (%p546) target = $region114
        $region113: #{mlp_forward.1} parent=109 // pred_region
          _
        $region114: #{mlp_forward.1} parent=109 // pred_fallthru
          _
        %s549 = sand.u32 %s43, 1
        %s550 = sand.u32 %s43, 1
        %s551 = smul.addr %s550, 32
        %s552 = scalar_lea.vmem [#allocation2], %s551
        %p553 = pneg %p56
        %p554 = pneg %p53
        %p555 = pneg %p77
        %p556 = pneg %p74
        %p557 = pneg %p98
        %p558 = pneg %p95
        %p559 = pneg %p119
        %p560 = pneg %p116
        %p561 = pneg %p140
        %p562 = pneg %p137
        %p563 = pneg %p161
        %p564 = pneg %p158
        %p565 = pneg %p182
        %p566 = pneg %p179
        %p567 = pneg %p210
        %p568 = pneg %p207
        %s569 = sand.u32 %s197, 1
        %s570 = scalar_lea.sflag [#allocation4], %s569
        %s571 = sand.u32 %s197, 1
        %s572 = smul.addr %s571, 32
        %s573 = scalar_lea.vmem [#allocation3], %s572
        %s574 = smul.u32 2, %s26
        %s575 = ssub.s32 3, %s574
        %p576 = scmp.lt.s32.totalorder %s575, 2
        %s577 = scalar_select %p576, %s575, 2
        %s578 = smul.u32 16, %s577
        %s579 = smul.u32 2, %s26
        %s580 = ssub.s32 3, %s579
        %p581 = scmp.lt.s32.totalorder %s580, 2
        %s582 = scalar_select %p581, %s580, 2
        %s583 = smul.u32 16, %s582
        %v584 = vld [vmem:[%s545] sm:$0xff]
        %v585 = vld [vmem:[%s545 + $0x8] sm:$0xff]
        %v586 = vld [vmem:[%s545 + $0x10] sm:$0xff]
        %v587 = vld [vmem:[%s545 + $0x18] sm:$0xff]
        %v588 = vld [vmem:[%s1] sm:$0xff]
        %v589 = vld [vmem:[%s1 + $0x8] sm:$0xff]
        %v590 = vld [vmem:[%s1 + $0x10] sm:$0xff]
        %v591 = vld [vmem:[%s1 + $0x18] sm:$0xff]
        %v592 = vld [vmem:[%s2] sm:$0xff]
        %v593 = vld [vmem:[%s2 + $0x8] sm:$0xff]
        %v594 = vld [vmem:[%s2 + $0x10] sm:$0xff]
        %v595 = vld [vmem:[%s2 + $0x18] sm:$0xff]
        %597 = vset.pattern.permute.xlu0 0
        %598 = vperm.xlu0 %597, %v592
        %v599 = vpop.permute.xlu0 %598
        %602 = vset.pattern.permute.xlu0 0
        %603 = vperm.xlu0 %602, %v593
        %v604 = vpop.permute.xlu0 %603
        %607 = vset.pattern.permute.xlu0 0
        %608 = vperm.xlu0 %607, %v594
        %v609 = vpop.permute.xlu0 %608
        %612 = vset.pattern.permute.xlu0 0
        %613 = vperm.xlu0 %612, %v595
        %v614 = vpop.permute.xlu0 %613
        %vm616 = vcmask 130048
        %v618 = vsel %vm616, %v588, 0
        %v621 = vsel %vm616, %v589, 0
        %v624 = vsel %vm616, %v590, 0
        %v627 = vsel %vm616, %v591, 0
        %629 = vmatpush.msra.mxu0 0.0
        %630 = vmatpush.msra.mxu0 0.0
        %631 = vmatpush.msra.mxu0 0.0
        %632 = vmatpush.msra.mxu0 0.0
        %633 = vmatpush.msra.mxu0 0.0
        %634 = vmatpush.msra.mxu0 0.0
        %635 = vmatpush.msra.mxu0 0.0
        %636 = vmatpush.msra.mxu0 0.0
        %637 = vmatpush.msra.mxu0 0.0
        %638 = vmatpush.msra.mxu0 0.0
        %639 = vmatpush.msra.mxu0 0.0
        %640 = vmatpush.msra.mxu0 0.0
        %641 = vmatpush.msra.mxu0 0.0
        %642 = vmatpush.msra.mxu0 0.0
        %643 = vmatpush.msra.mxu0 %v586
        %644 = vmatpush.msra.mxu0 %v584
        %645 = vmatmul.f32.gmra.mxu0 %v618
        %v646 = vpop.f32.mrf.mxu0
        %v647 = vadd.f32 %v599, %v646
        %648 = vmatmul.f32.gmra.mxu0 %v621
        %v649 = vpop.f32.mrf.mxu0
        %v650 = vadd.f32 %v604, %v649
        %651 = vmatmul.f32.gmra.mxu0 %v624
        %v652 = vpop.f32.mrf.mxu0
        %v653 = vadd.f32 %v609, %v652
        %654 = vmatmul.f32.gmra.mxu0 %v627
        %v655 = vpop.f32.mrf.mxu0
        %v656 = vadd.f32 %v614, %v655
        %657 = vdwg.mxu0
        %658 = vmatpush.msra.mxu0 0.0
        %659 = vmatpush.msra.mxu0 0.0
        %660 = vmatpush.msra.mxu0 0.0
        %661 = vmatpush.msra.mxu0 0.0
        %662 = vmatpush.msra.mxu0 0.0
        %663 = vmatpush.msra.mxu0 0.0
        %664 = vmatpush.msra.mxu0 0.0
        %665 = vmatpush.msra.mxu0 0.0
        %666 = vmatpush.msra.mxu0 0.0
        %667 = vmatpush.msra.mxu0 0.0
        %668 = vmatpush.msra.mxu0 0.0
        %669 = vmatpush.msra.mxu0 0.0
        %670 = vmatpush.msra.mxu0 0.0
        %671 = vmatpush.msra.mxu0 0.0
        %672 = vmatpush.msra.mxu0 %v587
        %673 = vmatpush.msra.mxu0 %v585
        %674 = vmatmul.f32.gmra.mxu0 %v618
        %v675 = vpop.f32.mrf.mxu0
        %v676 = vadd.f32 %v599, %v675
        %677 = vmatmul.f32.gmra.mxu0 %v621
        %v678 = vpop.f32.mrf.mxu0
        %v679 = vadd.f32 %v604, %v678
        %680 = vmatmul.f32.gmra.mxu0 %v624
        %v681 = vpop.f32.mrf.mxu0
        %v682 = vadd.f32 %v609, %v681
        %683 = vmatmul.f32.gmra.mxu0 %v627
        %v684 = vpop.f32.mrf.mxu0
        %v685 = vadd.f32 %v614, %v684
        %686 = vdwg.mxu0
        %v687 = vadd.f32 %v647, %v650
        %v688 = vadd.f32 %v687, %v653
        %v689 = vadd.f32 %v688, %v656
        %v690 = vrot.slane %v689, 4
        %v691 = vadd.f32 %v689, %v690
        %v692 = vrot.slane %v691, 2
        %v693 = vadd.f32 %v691, %v692
        %v694 = vrot.slane %v693, 1
        %v695 = vadd.f32 %v693, %v694
        %v696 = vadd.f32 %v676, %v679
        %v697 = vadd.f32 %v696, %v682
        %v698 = vadd.f32 %v697, %v685
        %v699 = vrot.slane %v698, 4
        %v700 = vadd.f32 %v698, %v699
        %v701 = vrot.slane %v700, 2
        %v702 = vadd.f32 %v700, %v701
        %v703 = vrot.slane %v702, 1
        %v704 = vadd.f32 %v702, %v703
        %v705 = vrcp.pop 32.0
        %v706 = vmul.f32 32.0, %v705
        %v707 = vsub.f32 1.0, %v706
        %v708 = vmul.f32 %v705, %v707
        %v709 = vadd.f32 %v705, %v708
        %vm710 = vweird.f32 %v705
        %v711 = vsel %vm710, %v705, %v709
        %v712 = vmul.f32 %v695, %v711
        %v713 = vmul.f32 %v704, %v711
        %v714 = vsub.f32 %v647, %v712
        %v715 = vsub.f32 %v676, %v713
        %v716 = vsub.f32 %v650, %v712
        %v717 = vsub.f32 %v679, %v713
        %v718 = vsub.f32 %v653, %v712
        %v719 = vsub.f32 %v682, %v713
        %v720 = vsub.f32 %v656, %v712
        %v721 = vsub.f32 %v685, %v713
        %v722 = vmul.f32 %v714, %v714
        %v723 = vmul.f32 %v715, %v715
        %v724 = vmul.f32 %v716, %v716
        %v725 = vmul.f32 %v717, %v717
        %v726 = vmul.f32 %v718, %v718
        %v727 = vmul.f32 %v719, %v719
        %v728 = vmul.f32 %v720, %v720
        %v729 = vmul.f32 %v721, %v721
        %v730 = vadd.f32 %v722, %v724
        %v731 = vadd.f32 %v730, %v726
        %v732 = vadd.f32 %v731, %v728
        %v733 = vrot.slane %v732, 4
        %v734 = vadd.f32 %v732, %v733
        %v735 = vrot.slane %v734, 2
        %v736 = vadd.f32 %v734, %v735
        %v737 = vrot.slane %v736, 1
        %v738 = vadd.f32 %v736, %v737
        %v739 = vadd.f32 %v723, %v725
        %v740 = vadd.f32 %v739, %v727
        %v741 = vadd.f32 %v740, %v729
        %v742 = vrot.slane %v741, 4
        %v743 = vadd.f32 %v741, %v742
        %v744 = vrot.slane %v743, 2
        %v745 = vadd.f32 %v743, %v744
        %v746 = vrot.slane %v745, 1
        %v747 = vadd.f32 %v745, %v746
        %v748 = vmul.f32 %v738, %v711
        %v749 = vmul.f32 %v747, %v711
        %v750 = vadd.f32 %v748, 1e-05
        %v751 = vadd.f32 %v749, 1e-05
        %v752 = vrsqrt.pop %v750
        %v753 = vmul.f32 %v752, %v750
        %v754 = vmul.f32 %v753, %v752
        %v755 = vmul.f32 0.5, %v754
        %v756 = vsub.f32 1.5, %v755
        %v757 = vmul.f32 %v752, %v756
        %vm758 = vweird.f32 %v750
        %vm759 = vweird.f32 %v752
        %vm760 = vmor %vm758, %vm759
        %v761 = vsel %vm760, %v752, %v757
        %v762 = vrsqrt.pop %v751
        %v763 = vmul.f32 %v762, %v751
        %v764 = vmul.f32 %v763, %v762
        %v765 = vmul.f32 0.5, %v764
        %v766 = vsub.f32 1.5, %v765
        %v767 = vmul.f32 %v762, %v766
        %vm768 = vweird.f32 %v751
        %vm769 = vweird.f32 %v762
        %vm770 = vmor %vm768, %vm769
        %v771 = vsel %vm770, %v762, %v767
        %v772 = vmul.f32 %v714, %v761
        %v773 = vmul.f32 %v715, %v771
        %v774 = vmul.f32 %v716, %v761
        %v775 = vmul.f32 %v717, %v771
        %v776 = vmul.f32 %v718, %v761
        %v777 = vmul.f32 %v719, %v771
        %v778 = vmul.f32 %v720, %v761
        %v779 = vmul.f32 %v721, %v771
        %v780 = vld [vmem:[%s3] sm:$0xff]
        %v781 = vld [vmem:[%s3 + $0x8] sm:$0xff]
        %v782 = vld [vmem:[%s3 + $0x10] sm:$0xff]
        %v783 = vld [vmem:[%s3 + $0x18] sm:$0xff]
        %785 = vset.pattern.permute.xlu0 0
        %786 = vperm.xlu0 %785, %v780
        %v787 = vpop.permute.xlu0 %786
        %790 = vset.pattern.permute.xlu0 0
        %791 = vperm.xlu0 %790, %v781
        %v792 = vpop.permute.xlu0 %791
        %795 = vset.pattern.permute.xlu0 0
        %796 = vperm.xlu0 %795, %v782
        %v797 = vpop.permute.xlu0 %796
        %800 = vset.pattern.permute.xlu0 0
        %801 = vperm.xlu0 %800, %v783
        %v802 = vpop.permute.xlu0 %801
        %v804 = vmul.f32 %v772, %v787
        %v805 = vmul.f32 %v773, %v787
        %v806 = vmul.f32 %v774, %v792
        %v807 = vmul.f32 %v775, %v792
        %v808 = vmul.f32 %v776, %v797
        %v809 = vmul.f32 %v777, %v797
        %v810 = vmul.f32 %v778, %v802
        %v811 = vmul.f32 %v779, %v802
        %v812 = vld [vmem:[%s4] sm:$0xff]
        %v813 = vld [vmem:[%s4 + $0x8] sm:$0xff]
        %v814 = vld [vmem:[%s4 + $0x10] sm:$0xff]
        %v815 = vld [vmem:[%s4 + $0x18] sm:$0xff]
        %817 = vset.pattern.permute.xlu0 0
        %818 = vperm.xlu0 %817, %v812
        %v819 = vpop.permute.xlu0 %818
        %822 = vset.pattern.permute.xlu0 0
        %823 = vperm.xlu0 %822, %v813
        %v824 = vpop.permute.xlu0 %823
        %827 = vset.pattern.permute.xlu0 0
        %828 = vperm.xlu0 %827, %v814
        %v829 = vpop.permute.xlu0 %828
        %832 = vset.pattern.permute.xlu0 0
        %833 = vperm.xlu0 %832, %v815
        %v834 = vpop.permute.xlu0 %833
        %v836 = vadd.f32 %v804, %v819
        %v837 = vadd.f32 %v805, %v819
        %v838 = vadd.f32 %v806, %v824
        %v839 = vadd.f32 %v807, %v824
        %v840 = vadd.f32 %v808, %v829
        %v841 = vadd.f32 %v809, %v829
        %v842 = vadd.f32 %v810, %v834
        %v843 = vadd.f32 %v811, %v834
        %v844 = vmul.f32 %v836, 0.5
        %v845 = vmul.f32 %v837, 0.5
        %v846 = vmul.f32 %v838, 0.5
        %v847 = vmul.f32 %v839, 0.5
        %v848 = vmul.f32 %v840, 0.5
        %v849 = vmul.f32 %v841, 0.5
        %v850 = vmul.f32 %v842, 0.5
        %v851 = vmul.f32 %v843, 0.5
        %v852 = vmul.f32 %v836, 0.70710677
        %v853 = vmul.f32 %v837, 0.70710677
        %v854 = vmul.f32 %v838, 0.70710677
        %v855 = vmul.f32 %v839, 0.70710677
        %v856 = vmul.f32 %v840, 0.70710677
        %v857 = vmul.f32 %v841, 0.70710677
        %v858 = vmul.f32 %v842, 0.70710677
        %v859 = vmul.f32 %v843, 0.70710677
        %v860 = vmul.f32 %v852, %v852
        %v861 = vmin.f32 16.0, %v860
        %v862 = vmul.f32 %v861, 2.1237322e-06
        %v863 = vadd.f32 %v862, 0.00028619796
        %v864 = vmul.f32 %v861, %v863
        %v865 = vadd.f32 %v864, 0.0036580483
        %v866 = vmul.f32 %v861, %v865
        %v867 = vadd.f32 %v866, 0.05243302
        %v868 = vmul.f32 %v861, %v867
        %v869 = vadd.f32 %v868, 0.18741608
        %v870 = vmul.f32 %v861, %v869
        %v871 = vadd.f32 %v870, 1.1283791
        %v872 = vmul.f32 %v852, %v871
        %v873 = vmul.f32 %v861, 3.8918573e-05
        %v874 = vadd.f32 %v873, 0.001143296
        %v875 = vmul.f32 %v861, %v874
        %v876 = vadd.f32 %v875, 0.014752088
        %v877 = vmul.f32 %v861, %v876
        %v878 = vadd.f32 %v877, 0.112945676
        %v879 = vmul.f32 %v861, %v878
        %v880 = vadd.f32 %v879, 0.4994258
        %v881 = vmul.f32 %v861, %v880
        %v882 = vadd.f32 %v881, 1.0
        %v883 = vrcp.pop %v882
        %v884 = vmul.f32 %v882, %v883
        %v885 = vsub.f32 1.0, %v884
        %v886 = vmul.f32 %v883, %v885
        %v887 = vadd.f32 %v883, %v886
        %vm888 = vweird.f32 %v882
        %vm889 = vweird.f32 %v883
        %vm890 = vmor %vm888, %vm889
        %v891 = vsel %vm890, %v883, %v887
        %v892 = vand.u32 2147483647, %v882
        %vm893 = vcmp.eq.f32.partialorder %v892, 8.507059e+37
        %v894 = vand.u32 %v882, 2147483648
        %v895 = vor.u32 1.1754944e-38, %v894
        %v896 = vsel %vm893, %v895, %v891
        %v897 = vmul.f32 %v872, %v896
        %v898 = vmin.f32 %v897, 1.0
        %v899 = vmax.f32 %v898, -1.0
        %v900 = vmul.f32 %v853, %v853
        %v901 = vmin.f32 16.0, %v900
        %v902 = vmul.f32 %v901, 2.1237322e-06
        %v903 = vadd.f32 %v902, 0.00028619796
        %v904 = vmul.f32 %v901, %v903
        %v905 = vadd.f32 %v904, 0.0036580483
        %v906 = vmul.f32 %v901, %v905
        %v907 = vadd.f32 %v906, 0.05243302
        %v908 = vmul.f32 %v901, %v907
        %v909 = vadd.f32 %v908, 0.18741608
        %v910 = vmul.f32 %v901, %v909
        %v911 = vadd.f32 %v910, 1.1283791
        %v912 = vmul.f32 %v853, %v911
        %v913 = vmul.f32 %v901, 3.8918573e-05
        %v914 = vadd.f32 %v913, 0.001143296
        %v915 = vmul.f32 %v901, %v914
        %v916 = vadd.f32 %v915, 0.014752088
        %v917 = vmul.f32 %v901, %v916
        %v918 = vadd.f32 %v917, 0.112945676
        %v919 = vmul.f32 %v901, %v918
        %v920 = vadd.f32 %v919, 0.4994258
        %v921 = vmul.f32 %v901, %v920
        %v922 = vadd.f32 %v921, 1.0
        %v923 = vrcp.pop %v922
        %v924 = vmul.f32 %v922, %v923
        %v925 = vsub.f32 1.0, %v924
        %v926 = vmul.f32 %v923, %v925
        %v927 = vadd.f32 %v923, %v926
        %vm928 = vweird.f32 %v922
        %vm929 = vweird.f32 %v923
        %vm930 = vmor %vm928, %vm929
        %v931 = vsel %vm930, %v923, %v927
        %v932 = vand.u32 2147483647, %v922
        %vm933 = vcmp.eq.f32.partialorder %v932, 8.507059e+37
        %v934 = vand.u32 %v922, 2147483648
        %v935 = vor.u32 1.1754944e-38, %v934
        %v936 = vsel %vm933, %v935, %v931
        %v937 = vmul.f32 %v912, %v936
        %v938 = vmin.f32 %v937, 1.0
        %v939 = vmax.f32 %v938, -1.0
        %v940 = vmul.f32 %v854, %v854
        %v941 = vmin.f32 16.0, %v940
        %v942 = vmul.f32 %v941, 2.1237322e-06
        %v943 = vadd.f32 %v942, 0.00028619796
        %v944 = vmul.f32 %v941, %v943
        %v945 = vadd.f32 %v944, 0.0036580483
        %v946 = vmul.f32 %v941, %v945
        %v947 = vadd.f32 %v946, 0.05243302
        %v948 = vmul.f32 %v941, %v947
        %v949 = vadd.f32 %v948, 0.18741608
        %v950 = vmul.f32 %v941, %v949
        %v951 = vadd.f32 %v950, 1.1283791
        %v952 = vmul.f32 %v854, %v951
        %v953 = vmul.f32 %v941, 3.8918573e-05
        %v954 = vadd.f32 %v953, 0.001143296
        %v955 = vmul.f32 %v941, %v954
        %v956 = vadd.f32 %v955, 0.014752088
        %v957 = vmul.f32 %v941, %v956
        %v958 = vadd.f32 %v957, 0.112945676
        %v959 = vmul.f32 %v941, %v958
        %v960 = vadd.f32 %v959, 0.4994258
        %v961 = vmul.f32 %v941, %v960
        %v962 = vadd.f32 %v961, 1.0
        %v963 = vrcp.pop %v962
        %v964 = vmul.f32 %v962, %v963
        %v965 = vsub.f32 1.0, %v964
        %v966 = vmul.f32 %v963, %v965
        %v967 = vadd.f32 %v963, %v966
        %vm968 = vweird.f32 %v962
        %vm969 = vweird.f32 %v963
        %vm970 = vmor %vm968, %vm969
        %v971 = vsel %vm970, %v963, %v967
        %v972 = vand.u32 2147483647, %v962
        %vm973 = vcmp.eq.f32.partialorder %v972, 8.507059e+37
        %v974 = vand.u32 %v962, 2147483648
        %v975 = vor.u32 1.1754944e-38, %v974
        %v976 = vsel %vm973, %v975, %v971
        %v977 = vmul.f32 %v952, %v976
        %v978 = vmin.f32 %v977, 1.0
        %v979 = vmax.f32 %v978, -1.0
        %v980 = vmul.f32 %v855, %v855
        %v981 = vmin.f32 16.0, %v980
        %v982 = vmul.f32 %v981, 2.1237322e-06
        %v983 = vadd.f32 %v982, 0.00028619796
        %v984 = vmul.f32 %v981, %v983
        %v985 = vadd.f32 %v984, 0.0036580483
        %v986 = vmul.f32 %v981, %v985
        %v987 = vadd.f32 %v986, 0.05243302
        %v988 = vmul.f32 %v981, %v987
        %v989 = vadd.f32 %v988, 0.18741608
        %v990 = vmul.f32 %v981, %v989
        %v991 = vadd.f32 %v990, 1.1283791
        %v992 = vmul.f32 %v855, %v991
        %v993 = vmul.f32 %v981, 3.8918573e-05
        %v994 = vadd.f32 %v993, 0.001143296
        %v995 = vmul.f32 %v981, %v994
        %v996 = vadd.f32 %v995, 0.014752088
        %v997 = vmul.f32 %v981, %v996
        %v998 = vadd.f32 %v997, 0.112945676
        %v999 = vmul.f32 %v981, %v998
        %v1000 = vadd.f32 %v999, 0.4994258
        %v1001 = vmul.f32 %v981, %v1000
        %v1002 = vadd.f32 %v1001, 1.0
        %v1003 = vrcp.pop %v1002
        %v1004 = vmul.f32 %v1002, %v1003
        %v1005 = vsub.f32 1.0, %v1004
        %v1006 = vmul.f32 %v1003, %v1005
        %v1007 = vadd.f32 %v1003, %v1006
        %vm1008 = vweird.f32 %v1002
        %vm1009 = vweird.f32 %v1003
        %vm1010 = vmor %vm1008, %vm1009
        %v1011 = vsel %vm1010, %v1003, %v1007
        %v1012 = vand.u32 2147483647, %v1002
        %vm1013 = vcmp.eq.f32.partialorder %v1012, 8.507059e+37
        %v1014 = vand.u32 %v1002, 2147483648
        %v1015 = vor.u32 1.1754944e-38, %v1014
        %v1016 = vsel %vm1013, %v1015, %v1011
        %v1017 = vmul.f32 %v992, %v1016
        %v1018 = vmin.f32 %v1017, 1.0
        %v1019 = vmax.f32 %v1018, -1.0
        %v1020 = vmul.f32 %v856, %v856
        %v1021 = vmin.f32 16.0, %v1020
        %v1022 = vmul.f32 %v1021, 2.1237322e-06
        %v1023 = vadd.f32 %v1022, 0.00028619796
        %v1024 = vmul.f32 %v1021, %v1023
        %v1025 = vadd.f32 %v1024, 0.0036580483
        %v1026 = vmul.f32 %v1021, %v1025
        %v1027 = vadd.f32 %v1026, 0.05243302
        %v1028 = vmul.f32 %v1021, %v1027
        %v1029 = vadd.f32 %v1028, 0.18741608
        %v1030 = vmul.f32 %v1021, %v1029
        %v1031 = vadd.f32 %v1030, 1.1283791
        %v1032 = vmul.f32 %v856, %v1031
        %v1033 = vmul.f32 %v1021, 3.8918573e-05
        %v1034 = vadd.f32 %v1033, 0.001143296
        %v1035 = vmul.f32 %v1021, %v1034
        %v1036 = vadd.f32 %v1035, 0.014752088
        %v1037 = vmul.f32 %v1021, %v1036
        %v1038 = vadd.f32 %v1037, 0.112945676
        %v1039 = vmul.f32 %v1021, %v1038
        %v1040 = vadd.f32 %v1039, 0.4994258
        %v1041 = vmul.f32 %v1021, %v1040
        %v1042 = vadd.f32 %v1041, 1.0
        %v1043 = vrcp.pop %v1042
        %v1044 = vmul.f32 %v1042, %v1043
        %v1045 = vsub.f32 1.0, %v1044
        %v1046 = vmul.f32 %v1043, %v1045
        %v1047 = vadd.f32 %v1043, %v1046
        %vm1048 = vweird.f32 %v1042
        %vm1049 = vweird.f32 %v1043
        %vm1050 = vmor %vm1048, %vm1049
        %v1051 = vsel %vm1050, %v1043, %v1047
        %v1052 = vand.u32 2147483647, %v1042
        %vm1053 = vcmp.eq.f32.partialorder %v1052, 8.507059e+37
        %v1054 = vand.u32 %v1042, 2147483648
        %v1055 = vor.u32 1.1754944e-38, %v1054
        %v1056 = vsel %vm1053, %v1055, %v1051
        %v1057 = vmul.f32 %v1032, %v1056
        %v1058 = vmin.f32 %v1057, 1.0
        %v1059 = vmax.f32 %v1058, -1.0
        %v1060 = vmul.f32 %v857, %v857
        %v1061 = vmin.f32 16.0, %v1060
        %v1062 = vmul.f32 %v1061, 2.1237322e-06
        %v1063 = vadd.f32 %v1062, 0.00028619796
        %v1064 = vmul.f32 %v1061, %v1063
        %v1065 = vadd.f32 %v1064, 0.0036580483
        %v1066 = vmul.f32 %v1061, %v1065
        %v1067 = vadd.f32 %v1066, 0.05243302
        %v1068 = vmul.f32 %v1061, %v1067
        %v1069 = vadd.f32 %v1068, 0.18741608
        %v1070 = vmul.f32 %v1061, %v1069
        %v1071 = vadd.f32 %v1070, 1.1283791
        %v1072 = vmul.f32 %v857, %v1071
        %v1073 = vmul.f32 %v1061, 3.8918573e-05
        %v1074 = vadd.f32 %v1073, 0.001143296
        %v1075 = vmul.f32 %v1061, %v1074
        %v1076 = vadd.f32 %v1075, 0.014752088
        %v1077 = vmul.f32 %v1061, %v1076
        %v1078 = vadd.f32 %v1077, 0.112945676
        %v1079 = vmul.f32 %v1061, %v1078
        %v1080 = vadd.f32 %v1079, 0.4994258
        %v1081 = vmul.f32 %v1061, %v1080
        %v1082 = vadd.f32 %v1081, 1.0
        %v1083 = vrcp.pop %v1082
        %v1084 = vmul.f32 %v1082, %v1083
        %v1085 = vsub.f32 1.0, %v1084
        %v1086 = vmul.f32 %v1083, %v1085
        %v1087 = vadd.f32 %v1083, %v1086
        %vm1088 = vweird.f32 %v1082
        %vm1089 = vweird.f32 %v1083
        %vm1090 = vmor %vm1088, %vm1089
        %v1091 = vsel %vm1090, %v1083, %v1087
        %v1092 = vand.u32 2147483647, %v1082
        %vm1093 = vcmp.eq.f32.partialorder %v1092, 8.507059e+37
        %v1094 = vand.u32 %v1082, 2147483648
        %v1095 = vor.u32 1.1754944e-38, %v1094
        %v1096 = vsel %vm1093, %v1095, %v1091
        %v1097 = vmul.f32 %v1072, %v1096
        %v1098 = vmin.f32 %v1097, 1.0
        %v1099 = vmax.f32 %v1098, -1.0
        %v1100 = vmul.f32 %v858, %v858
        %v1101 = vmin.f32 16.0, %v1100
        %v1102 = vmul.f32 %v1101, 2.1237322e-06
        %v1103 = vadd.f32 %v1102, 0.00028619796
        %v1104 = vmul.f32 %v1101, %v1103
        %v1105 = vadd.f32 %v1104, 0.0036580483
        %v1106 = vmul.f32 %v1101, %v1105
        %v1107 = vadd.f32 %v1106, 0.05243302
        %v1108 = vmul.f32 %v1101, %v1107
        %v1109 = vadd.f32 %v1108, 0.18741608
        %v1110 = vmul.f32 %v1101, %v1109
        %v1111 = vadd.f32 %v1110, 1.1283791
        %v1112 = vmul.f32 %v858, %v1111
        %v1113 = vmul.f32 %v1101, 3.8918573e-05
        %v1114 = vadd.f32 %v1113, 0.001143296
        %v1115 = vmul.f32 %v1101, %v1114
        %v1116 = vadd.f32 %v1115, 0.014752088
        %v1117 = vmul.f32 %v1101, %v1116
        %v1118 = vadd.f32 %v1117, 0.112945676
        %v1119 = vmul.f32 %v1101, %v1118
        %v1120 = vadd.f32 %v1119, 0.4994258
        %v1121 = vmul.f32 %v1101, %v1120
        %v1122 = vadd.f32 %v1121, 1.0
        %v1123 = vrcp.pop %v1122
        %v1124 = vmul.f32 %v1122, %v1123
        %v1125 = vsub.f32 1.0, %v1124
        %v1126 = vmul.f32 %v1123, %v1125
        %v1127 = vadd.f32 %v1123, %v1126
        %vm1128 = vweird.f32 %v1122
        %vm1129 = vweird.f32 %v1123
        %vm1130 = vmor %vm1128, %vm1129
        %v1131 = vsel %vm1130, %v1123, %v1127
        %v1132 = vand.u32 2147483647, %v1122
        %vm1133 = vcmp.eq.f32.partialorder %v1132, 8.507059e+37
        %v1134 = vand.u32 %v1122, 2147483648
        %v1135 = vor.u32 1.1754944e-38, %v1134
        %v1136 = vsel %vm1133, %v1135, %v1131
        %v1137 = vmul.f32 %v1112, %v1136
        %v1138 = vmin.f32 %v1137, 1.0
        %v1139 = vmax.f32 %v1138, -1.0
        %v1140 = vmul.f32 %v859, %v859
        %v1141 = vmin.f32 16.0, %v1140
        %v1142 = vmul.f32 %v1141, 2.1237322e-06
        %v1143 = vadd.f32 %v1142, 0.00028619796
        %v1144 = vmul.f32 %v1141, %v1143
        %v1145 = vadd.f32 %v1144, 0.0036580483
        %v1146 = vmul.f32 %v1141, %v1145
        %v1147 = vadd.f32 %v1146, 0.05243302
        %v1148 = vmul.f32 %v1141, %v1147
        %v1149 = vadd.f32 %v1148, 0.18741608
        %v1150 = vmul.f32 %v1141, %v1149
        %v1151 = vadd.f32 %v1150, 1.1283791
        %v1152 = vmul.f32 %v859, %v1151
        %v1153 = vmul.f32 %v1141, 3.8918573e-05
        %v1154 = vadd.f32 %v1153, 0.001143296
        %v1155 = vmul.f32 %v1141, %v1154
        %v1156 = vadd.f32 %v1155, 0.014752088
        %v1157 = vmul.f32 %v1141, %v1156
        %v1158 = vadd.f32 %v1157, 0.112945676
        %v1159 = vmul.f32 %v1141, %v1158
        %v1160 = vadd.f32 %v1159, 0.4994258
        %v1161 = vmul.f32 %v1141, %v1160
        %v1162 = vadd.f32 %v1161, 1.0
        %v1163 = vrcp.pop %v1162
        %v1164 = vmul.f32 %v1162, %v1163
        %v1165 = vsub.f32 1.0, %v1164
        %v1166 = vmul.f32 %v1163, %v1165
        %v1167 = vadd.f32 %v1163, %v1166
        %vm1168 = vweird.f32 %v1162
        %vm1169 = vweird.f32 %v1163
        %vm1170 = vmor %vm1168, %vm1169
        %v1171 = vsel %vm1170, %v1163, %v1167
        %v1172 = vand.u32 2147483647, %v1162
        %vm1173 = vcmp.eq.f32.partialorder %v1172, 8.507059e+37
        %v1174 = vand.u32 %v1162, 2147483648
        %v1175 = vor.u32 1.1754944e-38, %v1174
        %v1176 = vsel %vm1173, %v1175, %v1171
        %v1177 = vmul.f32 %v1152, %v1176
        %v1178 = vmin.f32 %v1177, 1.0
        %v1179 = vmax.f32 %v1178, -1.0
        %v1180 = vadd.f32 %v899, 1.0
        %v1181 = vadd.f32 %v939, 1.0
        %v1182 = vadd.f32 %v979, 1.0
        %v1183 = vadd.f32 %v1019, 1.0
        %v1184 = vadd.f32 %v1059, 1.0
        %v1185 = vadd.f32 %v1099, 1.0
        %v1186 = vadd.f32 %v1139, 1.0
        %v1187 = vadd.f32 %v1179, 1.0
        %v1188 = vmul.f32 %v844, %v1180
        %v1189 = vmul.f32 %v845, %v1181
        %v1190 = vmul.f32 %v846, %v1182
        %v1191 = vmul.f32 %v847, %v1183
        %v1192 = vmul.f32 %v848, %v1184
        %v1193 = vmul.f32 %v849, %v1185
        %v1194 = vmul.f32 %v850, %v1186
        %v1195 = vmul.f32 %v851, %v1187
        %v1196 = vld [vmem:[%s5] sm:$0xff]
        %v1197 = vld [vmem:[%s5 + $0x8] sm:$0xff]
        %v1198 = vld [vmem:[%s6] sm:$0xff]
        %v1199 = vld [vmem:[%s6 + $0x8] sm:$0xff]
        %1201 = vset.pattern.permute.xlu0 0
        %1202 = vperm.xlu0 %1201, %v1198
        %v1203 = vpop.permute.xlu0 %1202
        %1206 = vset.pattern.permute.xlu0 0
        %1207 = vperm.xlu0 %1206, %v1199
        %v1208 = vpop.permute.xlu0 %1207
        %vm1210 = vcmask 261120
        %v1212 = vsel %vm1210, %v1196, 0
        %v1215 = vsel %vm1210, %v1197, 0
        %1217 = vmatpush.msra.mxu0 0.0
        %1218 = vmatpush.msra.mxu0 0.0
        %1219 = vmatpush.msra.mxu0 0.0
        %1220 = vmatpush.msra.mxu0 0.0
        %1221 = vmatpush.msra.mxu0 0.0
        %1222 = vmatpush.msra.mxu0 0.0
        %1223 = vmatpush.msra.mxu0 0.0
        %1224 = vmatpush.msra.mxu0 0.0
        %1225 = vmatpush.msra.mxu0 0.0
        %1226 = vmatpush.msra.mxu0 0.0
        %1227 = vmatpush.msra.mxu0 0.0
        %1228 = vmatpush.msra.mxu0 0.0
        %1229 = vmatpush.msra.mxu0 %v1194
        %1230 = vmatpush.msra.mxu0 %v1192
        %1231 = vmatpush.msra.mxu0 %v1190
        %1232 = vmatpush.msra.mxu0 %v1188
        %1233 = vmatmul.f32.gmra.mxu0 %v1212
        %v1234 = vpop.f32.mrf.mxu0
        %v1235 = vadd.f32 %v1203, %v1234
        %1236 = vmatmul.f32.gmra.mxu0 %v1215
        %v1237 = vpop.f32.mrf.mxu0
        %v1238 = vadd.f32 %v1208, %v1237
        %1239 = vdwg.mxu0
        %1240 = vmatpush.msra.mxu0 0.0
        %1241 = vmatpush.msra.mxu0 0.0
        %1242 = vmatpush.msra.mxu0 0.0
        %1243 = vmatpush.msra.mxu0 0.0
        %1244 = vmatpush.msra.mxu0 0.0
        %1245 = vmatpush.msra.mxu0 0.0
        %1246 = vmatpush.msra.mxu0 0.0
        %1247 = vmatpush.msra.mxu0 0.0
        %1248 = vmatpush.msra.mxu0 0.0
        %1249 = vmatpush.msra.mxu0 0.0
        %1250 = vmatpush.msra.mxu0 0.0
        %1251 = vmatpush.msra.mxu0 0.0
        %1252 = vmatpush.msra.mxu0 %v1195
        %1253 = vmatpush.msra.mxu0 %v1193
        %1254 = vmatpush.msra.mxu0 %v1191
        %1255 = vmatpush.msra.mxu0 %v1189
        %1256 = vmatmul.f32.gmra.mxu0 %v1212
        %v1257 = vpop.f32.mrf.mxu0
        %v1258 = vadd.f32 %v1203, %v1257
        %1259 = vmatmul.f32.gmra.mxu0 %v1215
        %v1260 = vpop.f32.mrf.mxu0
        %v1261 = vadd.f32 %v1208, %v1260
        %1262 = vdwg.mxu0
        %1263 = vst [vmem:[%s573] sm:$0xff] %v1235
        %1264 = vst [vmem:[%s573 + $0x8] sm:$0xff] %v1258
        %1265 = vst [vmem:[%s573 + $0x10] sm:$0xff] %v1238
        %1266 = vst [vmem:[%s573 + $0x18] sm:$0xff] %v1261
        %s1267 = sand.u32 %s197, 1
        %s1268 = scalar_lea.sflag [#allocation4], %s1267
        %s1269 = sand.u32 %s197, 1
        %s1270 = smul.addr %s1269, 32
        %s1271 = scalar_lea.vmem [#allocation3], %s1270
        // Predicated region
        $region115: #{mlp_forward.1} parent=109 // pred_check
          %p1272 = pneg %p207
        $region116: #{mlp_forward.1} parent=109 // pred_check_branch
          %1274 = sbr.rel (%p1272) target = $region118
        $region117: #{mlp_forward.1} parent=109 // pred_region
          %s1275 = smul.u32 2, %s26
          %s1276 = ssub.s32 3, %s1275
          %p1277 = scmp.lt.s32.totalorder %s1276, 2
          %s1278 = scalar_select %p1277, %s1276, 2
          %s1279 = smul.u32 16, %s1278
          %s1280 = ssub.s32 32, %s1279
          %s1281 = sshll.u32 %s1280, 4
          %1282 = vsyncadd %s1268, %s1281
          %p1283 = scmp.ne.s32.totalorder 0, %s1279
          %s1284 = smul.addr %s25, 6
          %s1285 = sadd.s32 %s1275, %s1284
          %s1286 = smul.addr %s1285, 8
          %s1287 = scalar_lea.hbm %s7, %s1286
          %s1288 = smul.u32 %s1278, 8
          %s1289 = smul.u32 %s1288, 2
          %s1290 = sshll.u32 %s1271, 4
          %s1291 = int_to_ptr.vmem [resolvable:$true] %s1290
          %s1292 = sshll.u32 %s1287, 4
          %s1293 = int_to_ptr.hbm [resolvable:$true] %s1292
          %s1294 = sshll.u32 %s1289, 4
          %1298 = dma.vmem_to_hbm [thread:$0]  (%p1283), %s1291, %s1294, %s1293, %s1268, 256, 384, %s1288
        $region118: #{mlp_forward.1} parent=109 // pred_fallthru
          _
      $region110: #{mlp_forward.1} parent=5 // pred_fallthru
        _
      %p1299 = scmp.le.s32.totalorder 2, %s16
      // Predicated region
      $region119: #{mlp_forward.1} parent=5 // pred_check
        %p1300 = pneg %p1299
      $region120: #{mlp_forward.1} parent=5 // pred_check_branch
        %1302 = sbr.rel (%p1300) target = $region122
      $region121: #{mlp_forward.1} parent=5 // pred_region
        %s1303 = ssub.s32 %s16, 2
        // Predicated region
        $region123: #{mlp_forward.1} parent=121 // pred_check
          %p1304 = pneg %p213
        $region124: #{mlp_forward.1} parent=121 // pred_check_branch
          %1306 = sbr.rel (%p1304) target = $region126
        $region125: #{mlp_forward.1} parent=121 // pred_region
          %s1307 = sand.u32 %s198, 1
          %s1308 = scalar_lea.sflag [#allocation4], %s1307
          %s1309 = sand.u32 %s198, 1
          %s1310 = smul.addr %s1309, 32
          %s1311 = scalar_lea.vmem [#allocation3], %s1310
          %1313 = dma.done %s1308, 512
        $region126: #{mlp_forward.1} parent=121 // pred_fallthru
          _
      $region122: #{mlp_forward.1} parent=5 // pred_fallthru
        _
    $region6: #{mlp_forward.1} parent=1 // loop_footer
      %s20 = sadd.s32 1, %s16
    $region7: #{mlp_forward.1} parent=1 // loop_footer_branch
      %15 = sbr.rel target = $region3
    $region8: #{mlp_forward.1} parent=1 // loop_exit
      _
    %1314 = vsyncpa [#allocation4], 1
    %s1315 = scalar_lea.sflag [#allocation4], 1
    %1316 = vsyncpa %s1315, 1

</llo_original>
